<compile_context>
chip_gen: v6e
topology: v6e:2x2x1
jax: 0.10.0
libtpu: 0.0.40
codegen_flags: <defaults>
</compile_context>

<pallas_src>
import math
from functools import partial

import jax
import jax.numpy as jnp
from jax.experimental import pallas as pl
from jax.experimental.pallas import tpu as pltpu

LN_EPS = 1e-5  # PyTorch nn.LayerNorm default


def _layer_norm(x, ln_ref):
    # x: (R, H) f32. ln_ref: (2, H) f32 rows = [gamma, beta]. Two-pass variance.
    g = ln_ref[0:1, :]
    b = ln_ref[1:2, :]
    mean = jnp.mean(x, axis=-1, keepdims=True)
    d = x - mean
    var = jnp.mean(d * d, axis=-1, keepdims=True)
    return d * jax.lax.rsqrt(var + LN_EPS) * g + b


def _encoder_layer_kernel(x_ref, wqkv_ref, bqkv_ref, wo_ref, bo_ref, ln1_ref,
                          w1_ref, b1_ref, w2_ref, b2_ref, ln2_ref, o_ref,
                          qkv_ref, ctx_ref, *, hid_dim, n_heads, seq_len,
                          block_rows):
    H = hid_dim
    hd = H // n_heads
    S = seq_len
    Bt = block_rows
    R = Bt * S
    bf16 = jnp.bfloat16

    # (Bt, S, H) -> (Bt*S, H): cheap leading-dim merge, lanes untouched.
    x = x_ref[...].reshape(R, H).astype(jnp.float32)

    # Fused QKV projection (softmax scale pre-folded into Wq/bq on host).
    # bf16 operands, f32 accumulation; result staged in VMEM scratch so the
    # head loop reloads slices from VMEM instead of keeping qkv live in vregs.
    qkv = jnp.dot(x.astype(bf16), wqkv_ref[...],
                  preferred_element_type=jnp.float32)
    qkv_ref[...] = qkv + bqkv_ref[...]

    # Per-head attention, batched over the Bt sequences of this block.
    for h in range(n_heads):
        qh = qkv_ref[:, h * hd:(h + 1) * hd].reshape(Bt, S, hd).astype(bf16)
        kh = qkv_ref[:, H + h * hd:H + (h + 1) * hd].reshape(Bt, S, hd).astype(bf16)
        vh = qkv_ref[:, 2 * H + h * hd:2 * H + (h + 1) * hd].reshape(Bt, S, hd).astype(bf16)

        s = jax.lax.dot_general(qh, kh, (((2,), (2,)), ((0,), (0,))),
                                preferred_element_type=jnp.float32)   # (Bt,S,S)
        m = jnp.max(s, axis=-1, keepdims=True)
        p = jnp.exp(s - m)
        inv = pl.reciprocal(jnp.sum(p, axis=-1, keepdims=True), approx=True)
        alpha = p * inv

        ctx_h = jax.lax.dot_general(alpha.astype(bf16), vh,
                                    (((2,), (1,)), ((0,), (0,))),
                                    preferred_element_type=jnp.float32)  # (Bt,S,hd)
        # Place this head's context at its lane offset in the (R, H) slab.
        ctx_ref[:, h * hd:(h + 1) * hd] = ctx_h.reshape(R, hd)

    # Single output projection with full contraction depth K = H.
    attn = jnp.dot(ctx_ref[...].astype(bf16), wo_ref[...],
                   preferred_element_type=jnp.float32) + bo_ref[...]

    # Residual + LayerNorm 1 (dropout is identity at inference).
    h1 = _layer_norm(x + attn, ln1_ref)

    # Feed-forward: relu(h1 @ W1 + b1) @ W2 + b2
    ff = jnp.dot(h1.astype(bf16), w1_ref[...],
                 preferred_element_type=jnp.float32) + b1_ref[...]
    ff = jnp.maximum(ff, 0.0)
    ff = jnp.dot(ff.astype(bf16), w2_ref[...],
                 preferred_element_type=jnp.float32) + b2_ref[...]

    # Residual + LayerNorm 2
    out = _layer_norm(h1 + ff, ln2_ref)
    o_ref[...] = out.reshape(Bt, S, H).astype(o_ref.dtype)


def pack_params(params, *, n_heads):
    """One-time packing (hoisted out of the forward path).

    Weight matrices -> bf16 (halves DMA + resident VMEM, feeds the MXU its
    native dtype); 1/sqrt(head_dim) folded into Wq/bq; biases & LN stay f32.
    Linear weights are stored transposed as (in, out); biases 1-D.
    """
    H = params["wq"].shape[0]
    P = params["w1"].shape[1]
    assert H % n_heads == 0
    inv_scale = 1.0 / math.sqrt(H // n_heads)
    wdt = jnp.bfloat16
    f32 = jnp.float32
    return dict(
        wqkv=jnp.concatenate([params["wq"] * inv_scale, params["wk"],
                              params["wv"]], axis=1).astype(wdt),        # (H, 3H)
        bqkv=jnp.concatenate([params["bq"] * inv_scale, params["bk"],
                              params["bv"]]).reshape(1, 3 * H).astype(f32),
        wo=params["wo"].astype(wdt),                                      # (H, H)
        bo=params["bo"].reshape(1, H).astype(f32),
        ln1=jnp.stack([params["ln1_g"], params["ln1_b"]]).astype(f32),    # (2, H)
        w1=params["w1"].astype(wdt),                                      # (H, P)
        b1=params["b1"].reshape(1, P).astype(f32),
        w2=params["w2"].astype(wdt),                                      # (P, H)
        b2=params["b2"].reshape(1, H).astype(f32),
        ln2=jnp.stack([params["ln2_g"], params["ln2_b"]]).astype(f32),    # (2, H)
    )


def encoder_layer(src, packed, *, n_heads, block_rows=None):
    """src: (B, S, H). packed: output of pack_params. Returns (B, S, H),
    matching EncodingLayer.forward(src) in eval mode."""
    B, S, H = src.shape
    P = packed["w1"].shape[1]
    assert H % n_heads == 0

    if block_rows is None:
        # Fill the MXU M dimension (~256 rows per grid step) with the largest
        # divisor of B not exceeding the target. (With very small B this may
        # leave a single grid step; for v7x megacore prefer B >= 2 steps.)
        target = max(1, 256 // S)
        block_rows = 1
        for d in range(1, B + 1):
            if B % d == 0 and d <= target:
                block_rows = d
    Bt = block_rows
    assert B % Bt == 0
    R = Bt * S

    kernel = partial(_encoder_layer_kernel, hid_dim=H, n_heads=n_heads,
                     seq_len=S, block_rows=Bt)
    const = lambda b: (0, 0)

    return pl.pallas_call(
        kernel,
        out_shape=jax.ShapeDtypeStruct((B, S, H), src.dtype),
        grid=(B // Bt,),
        in_specs=[
            pl.BlockSpec((Bt, S, H), lambda b: (b, 0, 0)),   # src rows
            pl.BlockSpec((H, 3 * H), const),                 # packed Wq|Wk|Wv (bf16)
            pl.BlockSpec((1, 3 * H), const),                 # packed bq|bk|bv
            pl.BlockSpec((H, H), const),                     # Wo (bf16)
            pl.BlockSpec((1, H), const),                     # bo
            pl.BlockSpec((2, H), const),                     # LN1 gamma/beta
            pl.BlockSpec((H, P), const),                     # W1 (bf16)
            pl.BlockSpec((1, P), const),                     # b1
            pl.BlockSpec((P, H), const),                     # W2 (bf16)
            pl.BlockSpec((1, H), const),                     # b2
            pl.BlockSpec((2, H), const),                     # LN2 gamma/beta
        ],
        out_specs=pl.BlockSpec((Bt, S, H), lambda b: (b, 0, 0)),
        scratch_shapes=[
            pltpu.VMEM((R, 3 * H), jnp.float32),   # staged QKV
            pltpu.VMEM((R, H), jnp.float32),       # per-head context slab
        ],
        compiler_params=pltpu.CompilerParams(
            dimension_semantics=("parallel",),     # batch steps shard across TCs
            vmem_limit_bytes=32 * 1024 * 1024,     # raise v5e's 16 MiB default
        ),
    )(src, packed["wqkv"], packed["bqkv"], packed["wo"], packed["bo"],
      packed["ln1"], packed["w1"], packed["b1"], packed["w2"], packed["b2"],
      packed["ln2"])


def _reference(src, params, n_heads):
    """Pure-JAX mirror of EncodingLayer.forward (eval mode, f32, highest precision)."""
    B, S, H = src.shape
    hd = H // n_heads
    scale = math.sqrt(hd)
    hp = jax.lax.Precision.HIGHEST
    x = src.astype(jnp.float32)

    def lin(t, w, b):
        return jnp.dot(t, w, precision=hp) + b

    q = lin(x, params["wq"], params["bq"]).reshape(B, S, n_heads, hd).transpose(0, 2, 1, 3)
    k = lin(x, params["wk"], params["bk"]).reshape(B, S, n_heads, hd).transpose(0, 2, 1, 3)
    v = lin(x, params["wv"], params["bv"]).reshape(B, S, n_heads, hd).transpose(0, 2, 1, 3)
    score = jnp.einsum("bhqd,bhkd->bhqk", q, k, precision=hp) / scale
    alpha = jax.nn.softmax(score, axis=-1)
    ctx = jnp.einsum("bhqk,bhkd->bhqd", alpha, v, precision=hp)
    ctx = ctx.transpose(0, 2, 1, 3).reshape(B, S, H)
    attn = lin(ctx, params["wo"], params["bo"])

    def ln(t, g, b):
        mean = jnp.mean(t, axis=-1, keepdims=True)
        var = jnp.mean((t - mean) ** 2, axis=-1, keepdims=True)
        return (t - mean) * jax.lax.rsqrt(var + LN_EPS) * g + b

    h = ln(x + attn, params["ln1_g"], params["ln1_b"])
    ff = jnp.maximum(lin(h, params["w1"], params["b1"]), 0.0)
    ff = lin(ff, params["w2"], params["b2"])
    return ln(h + ff, params["ln2_g"], params["ln2_b"])


if __name__ == "__main__":
    key = jax.random.PRNGKey(0)
    ks = jax.random.split(key, 17)

    # hid_dim=128 (lane-dense), n_heads=4 -> head_dim=32, pf_dim=256
    B, S, H, NH, P = 2, 16, 128, 4, 256
    std = 0.05
    src = jax.random.normal(ks[0], (B, S, H), dtype=jnp.float32)

    def w(k, shape):
        # bf16-representable weight values so kernel (bf16 weights) and the f32
        # reference see identical parameters; remaining error = activation casts.
        return (std * jax.random.normal(k, shape, dtype=jnp.float32)
                ).astype(jnp.bfloat16).astype(jnp.float32)

    params = dict(
        wq=w(ks[1], (H, H)), bq=w(ks[2], (H,)),
        wk=w(ks[3], (H, H)), bk=w(ks[4], (H,)),
        wv=w(ks[5], (H, H)), bv=w(ks[6], (H,)),
        wo=w(ks[7], (H, H)), bo=w(ks[8], (H,)),
        ln1_g=1.0 + 0.1 * jax.random.normal(ks[9], (H,), dtype=jnp.float32),
        ln1_b=0.1 * jax.random.normal(ks[10], (H,), dtype=jnp.float32),
        w1=w(ks[11], (H, P)), b1=w(ks[12], (P,)),
        w2=w(ks[13], (P, H)), b2=w(ks[14], (H,)),
        ln2_g=1.0 + 0.1 * jax.random.normal(ks[15], (H,), dtype=jnp.float32),
        ln2_b=0.1 * jax.random.normal(ks[16], (H,), dtype=jnp.float32),
    )

    packed = pack_params(params, n_heads=NH)       # one-time, outside forward path
    out = encoder_layer(src, packed, n_heads=NH)
    out = jax.block_until_ready(out)

    ref = _reference(src, params, NH)
    assert out.shape == (B, S, H), out.shape
    max_err = float(jnp.max(jnp.abs(out - ref)))
    # bf16 MXU operands (f32 accumulation) -> ~1e-3 level differences vs f32 ref.
    assert jnp.allclose(out, ref, atol=1e-2, rtol=1e-2), max_err
    print("KERNEL_OK")
</pallas_src>

<mosaic_0001>
module attributes {stable_mosaic.version = 11 : i64} {
  func.func @_encoder_layer_kernel(%arg0: i32, %arg1: memref<2x16x128xf32, #tpu.memory_space<vmem>>, %arg2: memref<128x384xbf16, #tpu.memory_space<vmem>>, %arg3: memref<1x384xf32, #tpu.memory_space<vmem>>, %arg4: memref<128x128xbf16, #tpu.memory_space<vmem>>, %arg5: memref<1x128xf32, #tpu.memory_space<vmem>>, %arg6: memref<2x128xf32, #tpu.memory_space<vmem>>, %arg7: memref<128x256xbf16, #tpu.memory_space<vmem>>, %arg8: memref<1x256xf32, #tpu.memory_space<vmem>>, %arg9: memref<256x128xbf16, #tpu.memory_space<vmem>>, %arg10: memref<1x128xf32, #tpu.memory_space<vmem>>, %arg11: memref<2x128xf32, #tpu.memory_space<vmem>>, %arg12: memref<2x16x128xf32, #tpu.memory_space<vmem>>, %arg13: memref<32x384xf32, #tpu.memory_space<vmem>>, %arg14: memref<32x128xf32, #tpu.memory_space<vmem>>) attributes {dimension_semantics = [#tpu.dimension_semantics<parallel>], iteration_bounds = array<i64: 1>, scalar_prefetch = 0 : i64, scratch_operands = 2 : i64, tpu.core_type = #tpu.core_type<tc>, window_params = [{transform_indices = @transform_0, window_bounds = array<i64: 2, 16, 128>}, {pipeline_mode = #tpu.pipeline_mode<synchronous>, transform_indices = @transform_1, window_bounds = array<i64: 128, 384>}, {pipeline_mode = #tpu.pipeline_mode<synchronous>, transform_indices = @transform_2, window_bounds = array<i64: 1, 384>}, {pipeline_mode = #tpu.pipeline_mode<synchronous>, transform_indices = @transform_3, window_bounds = array<i64: 128, 128>}, {pipeline_mode = #tpu.pipeline_mode<synchronous>, transform_indices = @transform_4, window_bounds = array<i64: 1, 128>}, {pipeline_mode = #tpu.pipeline_mode<synchronous>, transform_indices = @transform_5, window_bounds = array<i64: 2, 128>}, {pipeline_mode = #tpu.pipeline_mode<synchronous>, transform_indices = @transform_6, window_bounds = array<i64: 128, 256>}, {pipeline_mode = #tpu.pipeline_mode<synchronous>, transform_indices = @transform_7, window_bounds = array<i64: 1, 256>}, {pipeline_mode = #tpu.pipeline_mode<synchronous>, transform_indices = @transform_8, window_bounds = array<i64: 256, 128>}, {pipeline_mode = #tpu.pipeline_mode<synchronous>, transform_indices = @transform_9, window_bounds = array<i64: 1, 128>}, {pipeline_mode = #tpu.pipeline_mode<synchronous>, transform_indices = @transform_10, window_bounds = array<i64: 2, 128>}, {transform_indices = @transform_11, window_bounds = array<i64: 2, 16, 128>}]} {
    %c0 = arith.constant 0 : index
    %c0_0 = arith.constant 0 : index
    %c0_1 = arith.constant 0 : index
    %0 = vector.load %arg1[%c0, %c0_0, %c0_1] : memref<2x16x128xf32, #tpu.memory_space<vmem>>, vector<2x16x128xf32>
    %1 = vector.shape_cast %0 : vector<2x16x128xf32> to vector<32x128xf32>
    %2 = arith.truncf %1 : vector<32x128xf32> to vector<32x128xbf16>
    %c0_2 = arith.constant 0 : index
    %c0_3 = arith.constant 0 : index
    %3 = vector.load %arg2[%c0_2, %c0_3] : memref<128x384xbf16, #tpu.memory_space<vmem>>, vector<128x384xbf16>
    %cst = arith.constant dense<0.000000e+00> : vector<32x384xf32>
    %4 = tpu.matmul %2, %3, %cst {dimension_numbers = #tpu.dot_dimension_numbers<[1], [0], [0], [1], [0, 0, 1, 1], [], []>} : vector<32x128xbf16>, vector<128x384xbf16>, vector<32x384xf32> -> vector<32x384xf32>
    %c0_4 = arith.constant 0 : index
    %c0_5 = arith.constant 0 : index
    %5 = vector.load %arg3[%c0_4, %c0_5] : memref<1x384xf32, #tpu.memory_space<vmem>>, vector<1x384xf32>
    %6 = vector.broadcast %5 : vector<1x384xf32> to vector<32x384xf32>
    %7 = arith.addf %4, %6 : vector<32x384xf32>
    %c0_6 = arith.constant 0 : index
    %c0_7 = arith.constant 0 : index
    %8 = vector.load %arg13[%c0_6, %c0_7] : memref<32x384xf32, #tpu.memory_space<vmem>>, vector<32x384xf32>
    tpu.vector_store %arg13[%c0_6, %c0_7], %7 {strides = array<i32>} : memref<32x384xf32, #tpu.memory_space<vmem>>, vector<32x384xf32>,
    %c0_8 = arith.constant 0 : index
    %c0_9 = arith.constant 0 : index
    %9 = vector.load %arg13[%c0_8, %c0_9] : memref<32x384xf32, #tpu.memory_space<vmem>>, vector<32x32xf32>
    %10 = vector.shape_cast %9 : vector<32x32xf32> to vector<2x16x32xf32>
    %11 = arith.truncf %10 : vector<2x16x32xf32> to vector<2x16x32xbf16>
    %c0_10 = arith.constant 0 : index
    %c128 = arith.constant 128 : index
    %12 = vector.load %arg13[%c0_10, %c128] : memref<32x384xf32, #tpu.memory_space<vmem>>, vector<32x32xf32>
    %13 = vector.shape_cast %12 : vector<32x32xf32> to vector<2x16x32xf32>
    %14 = arith.truncf %13 : vector<2x16x32xf32> to vector<2x16x32xbf16>
    %c0_11 = arith.constant 0 : index
    %c256 = arith.constant 256 : index
    %15 = vector.load %arg13[%c0_11, %c256] : memref<32x384xf32, #tpu.memory_space<vmem>>, vector<32x32xf32>
    %16 = vector.shape_cast %15 : vector<32x32xf32> to vector<2x16x32xf32>
    %17 = arith.truncf %16 : vector<2x16x32xf32> to vector<2x16x32xbf16>
    %cst_12 = arith.constant dense<0.000000e+00> : vector<2x16x16xf32>
    %18 = tpu.matmul %11, %14, %cst_12 {dimension_numbers = #tpu.dot_dimension_numbers<[2], [2], [1], [1], [0, 0, 0, 1, 1, 1], [0], [0]>} : vector<2x16x32xbf16>, vector<2x16x32xbf16>, vector<2x16x16xf32> -> vector<2x16x16xf32>
    %cst_13 = arith.constant dense<0xFF800000> : vector<2x16xf32>
    %19 = vector.multi_reduction <maximumf>, %18, %cst_13 [2] : vector<2x16x16xf32> to vector<2x16xf32>
    %20 = vector.shape_cast %19 : vector<2x16xf32> to vector<2x16x1xf32>
    %21 = vector.broadcast %20 : vector<2x16x1xf32> to vector<2x16x16xf32>
    %22 = arith.subf %18, %21 : vector<2x16x16xf32>
    %23 = math.exp %22 : vector<2x16x16xf32>
    %cst_14 = arith.constant dense<0.000000e+00> : vector<2x16xf32>
    %24 = vector.multi_reduction <add>, %23, %cst_14 [2] : vector<2x16x16xf32> to vector<2x16xf32>
    %25 = vector.shape_cast %24 : vector<2x16xf32> to vector<2x16x1xf32>
    %26 = tpu.reciprocal %25 {approx = true} : vector<2x16x1xf32> -> vector<2x16x1xf32>
    %27 = vector.broadcast %26 : vector<2x16x1xf32> to vector<2x16x16xf32>
    %28 = arith.mulf %23, %27 : vector<2x16x16xf32>
    %29 = arith.truncf %28 : vector<2x16x16xf32> to vector<2x16x16xbf16>
    %cst_15 = arith.constant dense<0.000000e+00> : vector<2x16x32xf32>
    %30 = tpu.matmul %29, %17, %cst_15 {dimension_numbers = #tpu.dot_dimension_numbers<[2], [1], [1], [2], [0, 0, 0, 1, 1, 2], [0], [0]>} : vector<2x16x16xbf16>, vector<2x16x32xbf16>, vector<2x16x32xf32> -> vector<2x16x32xf32>
    %31 = vector.shape_cast %30 : vector<2x16x32xf32> to vector<32x32xf32>
    %c0_16 = arith.constant 0 : index
    %c0_17 = arith.constant 0 : index
    %32 = vector.load %arg14[%c0_16, %c0_17] : memref<32x128xf32, #tpu.memory_space<vmem>>, vector<32x32xf32>
    tpu.vector_store %arg14[%c0_16, %c0_17], %31 {strides = array<i32>} : memref<32x128xf32, #tpu.memory_space<vmem>>, vector<32x32xf32>,
    %c0_18 = arith.constant 0 : index
    %c32 = arith.constant 32 : index
    %33 = vector.load %arg13[%c0_18, %c32] : memref<32x384xf32, #tpu.memory_space<vmem>>, vector<32x32xf32>
    %34 = vector.shape_cast %33 : vector<32x32xf32> to vector<2x16x32xf32>
    %35 = arith.truncf %34 : vector<2x16x32xf32> to vector<2x16x32xbf16>
    %c0_19 = arith.constant 0 : index
    %c160 = arith.constant 160 : index
    %36 = vector.load %arg13[%c0_19, %c160] : memref<32x384xf32, #tpu.memory_space<vmem>>, vector<32x32xf32>
    %37 = vector.shape_cast %36 : vector<32x32xf32> to vector<2x16x32xf32>
    %38 = arith.truncf %37 : vector<2x16x32xf32> to vector<2x16x32xbf16>
    %c0_20 = arith.constant 0 : index
    %c288 = arith.constant 288 : index
    %39 = vector.load %arg13[%c0_20, %c288] : memref<32x384xf32, #tpu.memory_space<vmem>>, vector<32x32xf32>
    %40 = vector.shape_cast %39 : vector<32x32xf32> to vector<2x16x32xf32>
    %41 = arith.truncf %40 : vector<2x16x32xf32> to vector<2x16x32xbf16>
    %cst_21 = arith.constant dense<0.000000e+00> : vector<2x16x16xf32>
    %42 = tpu.matmul %35, %38, %cst_21 {dimension_numbers = #tpu.dot_dimension_numbers<[2], [2], [1], [1], [0, 0, 0, 1, 1, 1], [0], [0]>} : vector<2x16x32xbf16>, vector<2x16x32xbf16>, vector<2x16x16xf32> -> vector<2x16x16xf32>
    %cst_22 = arith.constant dense<0xFF800000> : vector<2x16xf32>
    %43 = vector.multi_reduction <maximumf>, %42, %cst_22 [2] : vector<2x16x16xf32> to vector<2x16xf32>
    %44 = vector.shape_cast %43 : vector<2x16xf32> to vector<2x16x1xf32>
    %45 = vector.broadcast %44 : vector<2x16x1xf32> to vector<2x16x16xf32>
    %46 = arith.subf %42, %45 : vector<2x16x16xf32>
    %47 = math.exp %46 : vector<2x16x16xf32>
    %cst_23 = arith.constant dense<0.000000e+00> : vector<2x16xf32>
    %48 = vector.multi_reduction <add>, %47, %cst_23 [2] : vector<2x16x16xf32> to vector<2x16xf32>
    %49 = vector.shape_cast %48 : vector<2x16xf32> to vector<2x16x1xf32>
    %50 = tpu.reciprocal %49 {approx = true} : vector<2x16x1xf32> -> vector<2x16x1xf32>
    %51 = vector.broadcast %50 : vector<2x16x1xf32> to vector<2x16x16xf32>
    %52 = arith.mulf %47, %51 : vector<2x16x16xf32>
    %53 = arith.truncf %52 : vector<2x16x16xf32> to vector<2x16x16xbf16>
    %cst_24 = arith.constant dense<0.000000e+00> : vector<2x16x32xf32>
    %54 = tpu.matmul %53, %41, %cst_24 {dimension_numbers = #tpu.dot_dimension_numbers<[2], [1], [1], [2], [0, 0, 0, 1, 1, 2], [0], [0]>} : vector<2x16x16xbf16>, vector<2x16x32xbf16>, vector<2x16x32xf32> -> vector<2x16x32xf32>
    %55 = vector.shape_cast %54 : vector<2x16x32xf32> to vector<32x32xf32>
    %c0_25 = arith.constant 0 : index
    %c32_26 = arith.constant 32 : index
    %56 = vector.load %arg14[%c0_25, %c32_26] : memref<32x128xf32, #tpu.memory_space<vmem>>, vector<32x32xf32>
    tpu.vector_store %arg14[%c0_25, %c32_26], %55 {strides = array<i32>} : memref<32x128xf32, #tpu.memory_space<vmem>>, vector<32x32xf32>,
    %c0_27 = arith.constant 0 : index
    %c64 = arith.constant 64 : index
    %57 = vector.load %arg13[%c0_27, %c64] : memref<32x384xf32, #tpu.memory_space<vmem>>, vector<32x32xf32>
    %58 = vector.shape_cast %57 : vector<32x32xf32> to vector<2x16x32xf32>
    %59 = arith.truncf %58 : vector<2x16x32xf32> to vector<2x16x32xbf16>
    %c0_28 = arith.constant 0 : index
    %c192 = arith.constant 192 : index
    %60 = vector.load %arg13[%c0_28, %c192] : memref<32x384xf32, #tpu.memory_space<vmem>>, vector<32x32xf32>
    %61 = vector.shape_cast %60 : vector<32x32xf32> to vector<2x16x32xf32>
    %62 = arith.truncf %61 : vector<2x16x32xf32> to vector<2x16x32xbf16>
    %c0_29 = arith.constant 0 : index
    %c320 = arith.constant 320 : index
    %63 = vector.load %arg13[%c0_29, %c320] : memref<32x384xf32, #tpu.memory_space<vmem>>, vector<32x32xf32>
    %64 = vector.shape_cast %63 : vector<32x32xf32> to vector<2x16x32xf32>
    %65 = arith.truncf %64 : vector<2x16x32xf32> to vector<2x16x32xbf16>
    %cst_30 = arith.constant dense<0.000000e+00> : vector<2x16x16xf32>
    %66 = tpu.matmul %59, %62, %cst_30 {dimension_numbers = #tpu.dot_dimension_numbers<[2], [2], [1], [1], [0, 0, 0, 1, 1, 1], [0], [0]>} : vector<2x16x32xbf16>, vector<2x16x32xbf16>, vector<2x16x16xf32> -> vector<2x16x16xf32>
    %cst_31 = arith.constant dense<0xFF800000> : vector<2x16xf32>
    %67 = vector.multi_reduction <maximumf>, %66, %cst_31 [2] : vector<2x16x16xf32> to vector<2x16xf32>
    %68 = vector.shape_cast %67 : vector<2x16xf32> to vector<2x16x1xf32>
    %69 = vector.broadcast %68 : vector<2x16x1xf32> to vector<2x16x16xf32>
    %70 = arith.subf %66, %69 : vector<2x16x16xf32>
    %71 = math.exp %70 : vector<2x16x16xf32>
    %cst_32 = arith.constant dense<0.000000e+00> : vector<2x16xf32>
    %72 = vector.multi_reduction <add>, %71, %cst_32 [2] : vector<2x16x16xf32> to vector<2x16xf32>
    %73 = vector.shape_cast %72 : vector<2x16xf32> to vector<2x16x1xf32>
    %74 = tpu.reciprocal %73 {approx = true} : vector<2x16x1xf32> -> vector<2x16x1xf32>
    %75 = vector.broadcast %74 : vector<2x16x1xf32> to vector<2x16x16xf32>
    %76 = arith.mulf %71, %75 : vector<2x16x16xf32>
    %77 = arith.truncf %76 : vector<2x16x16xf32> to vector<2x16x16xbf16>
    %cst_33 = arith.constant dense<0.000000e+00> : vector<2x16x32xf32>
    %78 = tpu.matmul %77, %65, %cst_33 {dimension_numbers = #tpu.dot_dimension_numbers<[2], [1], [1], [2], [0, 0, 0, 1, 1, 2], [0], [0]>} : vector<2x16x16xbf16>, vector<2x16x32xbf16>, vector<2x16x32xf32> -> vector<2x16x32xf32>
    %79 = vector.shape_cast %78 : vector<2x16x32xf32> to vector<32x32xf32>
    %c0_34 = arith.constant 0 : index
    %c64_35 = arith.constant 64 : index
    %80 = vector.load %arg14[%c0_34, %c64_35] : memref<32x128xf32, #tpu.memory_space<vmem>>, vector<32x32xf32>
    tpu.vector_store %arg14[%c0_34, %c64_35], %79 {strides = array<i32>} : memref<32x128xf32, #tpu.memory_space<vmem>>, vector<32x32xf32>,
    %c0_36 = arith.constant 0 : index
    %c96 = arith.constant 96 : index
    %81 = vector.load %arg13[%c0_36, %c96] : memref<32x384xf32, #tpu.memory_space<vmem>>, vector<32x32xf32>
    %82 = vector.shape_cast %81 : vector<32x32xf32> to vector<2x16x32xf32>
    %83 = arith.truncf %82 : vector<2x16x32xf32> to vector<2x16x32xbf16>
    %c0_37 = arith.constant 0 : index
    %c224 = arith.constant 224 : index
    %84 = vector.load %arg13[%c0_37, %c224] : memref<32x384xf32, #tpu.memory_space<vmem>>, vector<32x32xf32>
    %85 = vector.shape_cast %84 : vector<32x32xf32> to vector<2x16x32xf32>
    %86 = arith.truncf %85 : vector<2x16x32xf32> to vector<2x16x32xbf16>
    %c0_38 = arith.constant 0 : index
    %c352 = arith.constant 352 : index
    %87 = vector.load %arg13[%c0_38, %c352] : memref<32x384xf32, #tpu.memory_space<vmem>>, vector<32x32xf32>
    %88 = vector.shape_cast %87 : vector<32x32xf32> to vector<2x16x32xf32>
    %89 = arith.truncf %88 : vector<2x16x32xf32> to vector<2x16x32xbf16>
    %cst_39 = arith.constant dense<0.000000e+00> : vector<2x16x16xf32>
    %90 = tpu.matmul %83, %86, %cst_39 {dimension_numbers = #tpu.dot_dimension_numbers<[2], [2], [1], [1], [0, 0, 0, 1, 1, 1], [0], [0]>} : vector<2x16x32xbf16>, vector<2x16x32xbf16>, vector<2x16x16xf32> -> vector<2x16x16xf32>
    %cst_40 = arith.constant dense<0xFF800000> : vector<2x16xf32>
    %91 = vector.multi_reduction <maximumf>, %90, %cst_40 [2] : vector<2x16x16xf32> to vector<2x16xf32>
    %92 = vector.shape_cast %91 : vector<2x16xf32> to vector<2x16x1xf32>
    %93 = vector.broadcast %92 : vector<2x16x1xf32> to vector<2x16x16xf32>
    %94 = arith.subf %90, %93 : vector<2x16x16xf32>
    %95 = math.exp %94 : vector<2x16x16xf32>
    %cst_41 = arith.constant dense<0.000000e+00> : vector<2x16xf32>
    %96 = vector.multi_reduction <add>, %95, %cst_41 [2] : vector<2x16x16xf32> to vector<2x16xf32>
    %97 = vector.shape_cast %96 : vector<2x16xf32> to vector<2x16x1xf32>
    %98 = tpu.reciprocal %97 {approx = true} : vector<2x16x1xf32> -> vector<2x16x1xf32>
    %99 = vector.broadcast %98 : vector<2x16x1xf32> to vector<2x16x16xf32>
    %100 = arith.mulf %95, %99 : vector<2x16x16xf32>
    %101 = arith.truncf %100 : vector<2x16x16xf32> to vector<2x16x16xbf16>
    %cst_42 = arith.constant dense<0.000000e+00> : vector<2x16x32xf32>
    %102 = tpu.matmul %101, %89, %cst_42 {dimension_numbers = #tpu.dot_dimension_numbers<[2], [1], [1], [2], [0, 0, 0, 1, 1, 2], [0], [0]>} : vector<2x16x16xbf16>, vector<2x16x32xbf16>, vector<2x16x32xf32> -> vector<2x16x32xf32>
    %103 = vector.shape_cast %102 : vector<2x16x32xf32> to vector<32x32xf32>
    %c0_43 = arith.constant 0 : index
    %c96_44 = arith.constant 96 : index
    %104 = vector.load %arg14[%c0_43, %c96_44] : memref<32x128xf32, #tpu.memory_space<vmem>>, vector<32x32xf32>
    tpu.vector_store %arg14[%c0_43, %c96_44], %103 {strides = array<i32>} : memref<32x128xf32, #tpu.memory_space<vmem>>, vector<32x32xf32>,
    %c0_45 = arith.constant 0 : index
    %c0_46 = arith.constant 0 : index
    %105 = vector.load %arg14[%c0_45, %c0_46] : memref<32x128xf32, #tpu.memory_space<vmem>>, vector<32x128xf32>
    %106 = arith.truncf %105 : vector<32x128xf32> to vector<32x128xbf16>
    %c0_47 = arith.constant 0 : index
    %c0_48 = arith.constant 0 : index
    %107 = vector.load %arg4[%c0_47, %c0_48] : memref<128x128xbf16, #tpu.memory_space<vmem>>, vector<128x128xbf16>
    %cst_49 = arith.constant dense<0.000000e+00> : vector<32x128xf32>
    %108 = tpu.matmul %106, %107, %cst_49 {dimension_numbers = #tpu.dot_dimension_numbers<[1], [0], [0], [1], [0, 0, 1, 1], [], []>} : vector<32x128xbf16>, vector<128x128xbf16>, vector<32x128xf32> -> vector<32x128xf32>
    %c0_50 = arith.constant 0 : index
    %c0_51 = arith.constant 0 : index
    %109 = vector.load %arg5[%c0_50, %c0_51] : memref<1x128xf32, #tpu.memory_space<vmem>>, vector<1x128xf32>
    %110 = vector.broadcast %109 : vector<1x128xf32> to vector<32x128xf32>
    %111 = arith.addf %108, %110 : vector<32x128xf32>
    %112 = arith.addf %1, %111 : vector<32x128xf32>
    %c0_52 = arith.constant 0 : index
    %c0_53 = arith.constant 0 : index
    %113 = vector.load %arg6[%c0_52, %c0_53] : memref<2x128xf32, #tpu.memory_space<vmem>>, vector<1x128xf32>
    %c1 = arith.constant 1 : index
    %c0_54 = arith.constant 0 : index
    %114 = vector.load %arg6[%c1, %c0_54] : memref<2x128xf32, #tpu.memory_space<vmem>>, vector<1x128xf32>
    %cst_55 = arith.constant dense<0.000000e+00> : vector<32xf32>
    %115 = vector.multi_reduction <add>, %112, %cst_55 [1] : vector<32x128xf32> to vector<32xf32>
    %116 = vector.shape_cast %115 : vector<32xf32> to vector<32x1xf32>
    %cst_56 = arith.constant 1.280000e+02 : f32
    %117 = vector.broadcast %cst_56 : f32 to vector<32x1xf32>
    %118 = arith.divf %116, %117 : vector<32x1xf32>
    %119 = vector.broadcast %118 : vector<32x1xf32> to vector<32x128xf32>
    %120 = arith.subf %112, %119 : vector<32x128xf32>
    %121 = arith.mulf %120, %120 : vector<32x128xf32>
    %cst_57 = arith.constant dense<0.000000e+00> : vector<32xf32>
    %122 = vector.multi_reduction <add>, %121, %cst_57 [1] : vector<32x128xf32> to vector<32xf32>
    %123 = vector.shape_cast %122 : vector<32xf32> to vector<32x1xf32>
    %cst_58 = arith.constant 1.280000e+02 : f32
    %124 = vector.broadcast %cst_58 : f32 to vector<32x1xf32>
    %125 = arith.divf %123, %124 : vector<32x1xf32>
    %cst_59 = arith.constant 9.99999974E-6 : f32
    %126 = vector.broadcast %cst_59 : f32 to vector<32x1xf32>
    %127 = arith.addf %125, %126 : vector<32x1xf32>
    %128 = math.rsqrt %127 : vector<32x1xf32>
    %129 = vector.broadcast %128 : vector<32x1xf32> to vector<32x128xf32>
    %130 = arith.mulf %120, %129 : vector<32x128xf32>
    %131 = vector.broadcast %113 : vector<1x128xf32> to vector<32x128xf32>
    %132 = arith.mulf %130, %131 : vector<32x128xf32>
    %133 = vector.broadcast %114 : vector<1x128xf32> to vector<32x128xf32>
    %134 = arith.addf %132, %133 : vector<32x128xf32>
    %135 = arith.truncf %134 : vector<32x128xf32> to vector<32x128xbf16>
    %c0_60 = arith.constant 0 : index
    %c0_61 = arith.constant 0 : index
    %136 = vector.load %arg7[%c0_60, %c0_61] : memref<128x256xbf16, #tpu.memory_space<vmem>>, vector<128x256xbf16>
    %cst_62 = arith.constant dense<0.000000e+00> : vector<32x256xf32>
    %137 = tpu.matmul %135, %136, %cst_62 {dimension_numbers = #tpu.dot_dimension_numbers<[1], [0], [0], [1], [0, 0, 1, 1], [], []>} : vector<32x128xbf16>, vector<128x256xbf16>, vector<32x256xf32> -> vector<32x256xf32>
    %c0_63 = arith.constant 0 : index
    %c0_64 = arith.constant 0 : index
    %138 = vector.load %arg8[%c0_63, %c0_64] : memref<1x256xf32, #tpu.memory_space<vmem>>, vector<1x256xf32>
    %139 = vector.broadcast %138 : vector<1x256xf32> to vector<32x256xf32>
    %140 = arith.addf %137, %139 : vector<32x256xf32>
    %cst_65 = arith.constant 0.000000e+00 : f32
    %141 = vector.broadcast %cst_65 : f32 to vector<32x256xf32>
    %142 = arith.maximumf %140, %141 : vector<32x256xf32>
    %143 = arith.truncf %142 : vector<32x256xf32> to vector<32x256xbf16>
    %c0_66 = arith.constant 0 : index
    %c0_67 = arith.constant 0 : index
    %144 = vector.load %arg9[%c0_66, %c0_67] : memref<256x128xbf16, #tpu.memory_space<vmem>>, vector<256x128xbf16>
    %cst_68 = arith.constant dense<0.000000e+00> : vector<32x128xf32>
    %145 = tpu.matmul %143, %144, %cst_68 {dimension_numbers = #tpu.dot_dimension_numbers<[1], [0], [0], [1], [0, 0, 1, 1], [], []>} : vector<32x256xbf16>, vector<256x128xbf16>, vector<32x128xf32> -> vector<32x128xf32>
    %c0_69 = arith.constant 0 : index
    %c0_70 = arith.constant 0 : index
    %146 = vector.load %arg10[%c0_69, %c0_70] : memref<1x128xf32, #tpu.memory_space<vmem>>, vector<1x128xf32>
    %147 = vector.broadcast %146 : vector<1x128xf32> to vector<32x128xf32>
    %148 = arith.addf %145, %147 : vector<32x128xf32>
    %149 = arith.addf %134, %148 : vector<32x128xf32>
    %c0_71 = arith.constant 0 : index
    %c0_72 = arith.constant 0 : index
    %150 = vector.load %arg11[%c0_71, %c0_72] : memref<2x128xf32, #tpu.memory_space<vmem>>, vector<1x128xf32>
    %c1_73 = arith.constant 1 : index
    %c0_74 = arith.constant 0 : index
    %151 = vector.load %arg11[%c1_73, %c0_74] : memref<2x128xf32, #tpu.memory_space<vmem>>, vector<1x128xf32>
    %cst_75 = arith.constant dense<0.000000e+00> : vector<32xf32>
    %152 = vector.multi_reduction <add>, %149, %cst_75 [1] : vector<32x128xf32> to vector<32xf32>
    %153 = vector.shape_cast %152 : vector<32xf32> to vector<32x1xf32>
    %cst_76 = arith.constant 1.280000e+02 : f32
    %154 = vector.broadcast %cst_76 : f32 to vector<32x1xf32>
    %155 = arith.divf %153, %154 : vector<32x1xf32>
    %156 = vector.broadcast %155 : vector<32x1xf32> to vector<32x128xf32>
    %157 = arith.subf %149, %156 : vector<32x128xf32>
    %158 = arith.mulf %157, %157 : vector<32x128xf32>
    %cst_77 = arith.constant dense<0.000000e+00> : vector<32xf32>
    %159 = vector.multi_reduction <add>, %158, %cst_77 [1] : vector<32x128xf32> to vector<32xf32>
    %160 = vector.shape_cast %159 : vector<32xf32> to vector<32x1xf32>
    %cst_78 = arith.constant 1.280000e+02 : f32
    %161 = vector.broadcast %cst_78 : f32 to vector<32x1xf32>
    %162 = arith.divf %160, %161 : vector<32x1xf32>
    %cst_79 = arith.constant 9.99999974E-6 : f32
    %163 = vector.broadcast %cst_79 : f32 to vector<32x1xf32>
    %164 = arith.addf %162, %163 : vector<32x1xf32>
    %165 = math.rsqrt %164 : vector<32x1xf32>
    %166 = vector.broadcast %165 : vector<32x1xf32> to vector<32x128xf32>
    %167 = arith.mulf %157, %166 : vector<32x128xf32>
    %168 = vector.broadcast %150 : vector<1x128xf32> to vector<32x128xf32>
    %169 = arith.mulf %167, %168 : vector<32x128xf32>
    %170 = vector.broadcast %151 : vector<1x128xf32> to vector<32x128xf32>
    %171 = arith.addf %169, %170 : vector<32x128xf32>
    %172 = vector.shape_cast %171 : vector<32x128xf32> to vector<2x16x128xf32>
    %c0_80 = arith.constant 0 : index
    %c0_81 = arith.constant 0 : index
    %c0_82 = arith.constant 0 : index
    %173 = vector.load %arg12[%c0_80, %c0_81, %c0_82] : memref<2x16x128xf32, #tpu.memory_space<vmem>>, vector<2x16x128xf32>
    tpu.vector_store %arg12[%c0_80, %c0_81, %c0_82], %172 {strides = array<i32>} : memref<2x16x128xf32, #tpu.memory_space<vmem>>, vector<2x16x128xf32>,
    return
  }
  func.func @transform_0(%arg0: i32) -> (i32, i32, i32) {
    %c0_i32 = arith.constant 0 : i32
    %c0_i32_0 = arith.constant 0 : i32
    %c0_i32_1 = arith.constant 0 : i32
    return %arg0, %c0_i32, %c0_i32_0 : i32, i32, i32
  }
  func.func @transform_1(%arg0: i32) -> (i32, i32) {
    %c0_i32 = arith.constant 0 : i32
    %c0_i32_0 = arith.constant 0 : i32
    %c0_i32_1 = arith.constant 0 : i32
    return %c0_i32, %c0_i32_0 : i32, i32
  }
  func.func @transform_2(%arg0: i32) -> (i32, i32) {
    %c0_i32 = arith.constant 0 : i32
    %c0_i32_0 = arith.constant 0 : i32
    %c0_i32_1 = arith.constant 0 : i32
    return %c0_i32, %c0_i32_0 : i32, i32
  }
  func.func @transform_3(%arg0: i32) -> (i32, i32) {
    %c0_i32 = arith.constant 0 : i32
    %c0_i32_0 = arith.constant 0 : i32
    %c0_i32_1 = arith.constant 0 : i32
    return %c0_i32, %c0_i32_0 : i32, i32
  }
  func.func @transform_4(%arg0: i32) -> (i32, i32) {
    %c0_i32 = arith.constant 0 : i32
    %c0_i32_0 = arith.constant 0 : i32
    %c0_i32_1 = arith.constant 0 : i32
    return %c0_i32, %c0_i32_0 : i32, i32
  }
  func.func @transform_5(%arg0: i32) -> (i32, i32) {
    %c0_i32 = arith.constant 0 : i32
    %c0_i32_0 = arith.constant 0 : i32
    %c0_i32_1 = arith.constant 0 : i32
    return %c0_i32, %c0_i32_0 : i32, i32
  }
  func.func @transform_6(%arg0: i32) -> (i32, i32) {
    %c0_i32 = arith.constant 0 : i32
    %c0_i32_0 = arith.constant 0 : i32
    %c0_i32_1 = arith.constant 0 : i32
    return %c0_i32, %c0_i32_0 : i32, i32
  }
  func.func @transform_7(%arg0: i32) -> (i32, i32) {
    %c0_i32 = arith.constant 0 : i32
    %c0_i32_0 = arith.constant 0 : i32
    %c0_i32_1 = arith.constant 0 : i32
    return %c0_i32, %c0_i32_0 : i32, i32
  }
  func.func @transform_8(%arg0: i32) -> (i32, i32) {
    %c0_i32 = arith.constant 0 : i32
    %c0_i32_0 = arith.constant 0 : i32
    %c0_i32_1 = arith.constant 0 : i32
    return %c0_i32, %c0_i32_0 : i32, i32
  }
  func.func @transform_9(%arg0: i32) -> (i32, i32) {
    %c0_i32 = arith.constant 0 : i32
    %c0_i32_0 = arith.constant 0 : i32
    %c0_i32_1 = arith.constant 0 : i32
    return %c0_i32, %c0_i32_0 : i32, i32
  }
  func.func @transform_10(%arg0: i32) -> (i32, i32) {
    %c0_i32 = arith.constant 0 : i32
    %c0_i32_0 = arith.constant 0 : i32
    %c0_i32_1 = arith.constant 0 : i32
    return %c0_i32, %c0_i32_0 : i32, i32
  }
  func.func @transform_11(%arg0: i32) -> (i32, i32, i32) {
    %c0_i32 = arith.constant 0 : i32
    %c0_i32_0 = arith.constant 0 : i32
    %c0_i32_1 = arith.constant 0 : i32
    return %arg0, %c0_i32, %c0_i32_0 : i32, i32, i32
  }
}

</mosaic_0001>

<llo_original>
// kernel: tpu_custom_call.1
$region0: #{tpu_custom_call.1}
  #allocation0 [shape = 'u32[]', space=smem, size = 0x4, offset = 0x4, fixed_abs, tag = 'smem constant byte address 0x4 - core index']
  #allocation1 [shape = 'u32[144,128]{1,0:T(1,128)}', space=vmem, size = 0x12000, scoped, tag = 'internal scratch']
  #allocation2 [shape = 'f32[32,384]{1,0:T(8,128)}', space=vmem, size = 0xc000, scoped, tag = 'scratch operand']
  #allocation3 [shape = 'f32[32,128]{1,0:T(8,128)}', space=vmem, size = 0x4000, scoped, tag = 'scratch operand']
  %s0 = inlined_call_operand.hbm [shape: f32[2,16,128], index: 0, kind: input, shape index: {}]
  %s1 = inlined_call_operand.hbm [shape: bf16[128,384], index: 1, kind: input, shape index: {}]
  %s2 = inlined_call_operand.vmem [shape: f32[1,384], index: 2, kind: input, shape index: {}]
  %s3 = inlined_call_operand.hbm [shape: bf16[128,128], index: 3, kind: input, shape index: {}]
  %s4 = inlined_call_operand.hbm [shape: f32[1,128], index: 4, kind: input, shape index: {}]
  %s5 = inlined_call_operand.vmem [shape: f32[2,128], index: 5, kind: input, shape index: {}]
  %s6 = inlined_call_operand.hbm [shape: bf16[128,256], index: 6, kind: input, shape index: {}]
  %s7 = inlined_call_operand.vmem [shape: f32[1,256], index: 7, kind: input, shape index: {}]
  %s8 = inlined_call_operand.hbm [shape: bf16[256,128], index: 8, kind: input, shape index: {}]
  %s9 = inlined_call_operand.vmem [shape: f32[1,128], index: 9, kind: input, shape index: {}]
  %s10 = inlined_call_operand.vmem [shape: f32[2,128], index: 10, kind: input, shape index: {}]
  %s11 = inlined_call_operand.hbm [shape: f32[2,16,128], index: 11, kind: output, shape index: {}]
  %s12 = sld [smem:[#allocation0]]
  $region78: #{tpu_custom_call.1} parent=0
    _
  %s14 = ssub.s32 1, %s12
  %s15 = scalar_select 0, %s14, %s12
  $region1: #{tpu_custom_call.1} parent=0
    #allocation4 [shape = 'u8[16384]{0}', space=vmem, size = 0x4000, scoped, tag = 'input window, operand 0, single buffered']
    #allocation5 [shape = 's32[1]{0}', space=sflag, size = 0x4, scoped, tag = 'scoped memory for tpu_custom_call.1']
    #allocation6 [shape = 's32[1]{0}', space=sflag, size = 0x4, scoped, tag = 'scoped memory for tpu_custom_call.1']
    #allocation7 [shape = 'u8[98304]{0}', space=vmem, size = 0x18000, scoped, tag = 'input window, operand 1, single buffered']
    #allocation8 [shape = 's32[1]{0}', space=sflag, size = 0x4, scoped, tag = 'scoped memory for tpu_custom_call.1']
    #allocation9 [shape = 'u8[32768]{0}', space=vmem, size = 0x8000, scoped, tag = 'input window, operand 3, single buffered']
    #allocation10 [shape = 'u8[512]{0}', space=vmem, size = 0x400, scoped, tag = 'input window, operand 4, single buffered']
    #allocation11 [shape = 's32[1]{0}', space=sflag, size = 0x4, scoped, tag = 'scoped memory for tpu_custom_call.1']
    #allocation12 [shape = 'u8[65536]{0}', space=vmem, size = 0x10000, scoped, tag = 'input window, operand 6, single buffered']
    #allocation13 [shape = 'u8[65536]{0}', space=vmem, size = 0x10000, scoped, tag = 'input window, operand 8, single buffered']
    #allocation14 [shape = 's32[1]{0}', space=sflag, size = 0x4, scoped, tag = 'scoped memory for tpu_custom_call.1']
    #allocation15 [shape = 'u8[16384]{0}', space=vmem, size = 0x4000, scoped, tag = 'output window, operand 0, single buffered']
    %16 = vsyncpa [#allocation5], 0
    %17 = vsyncpa [#allocation8], 0
    %18 = vsyncpa [#allocation11], 0
    %19 = vsyncpa [#allocation14], 0
    %20 = vsyncpa [#allocation6], 0
    // Predicated region
    $region2: #{tpu_custom_call.1} parent=1 // pred_check
      _
    $region3: #{tpu_custom_call.1} parent=1 // pred_check_branch
      %22 = sbr.rel (0) target = $region5
    $region4: #{tpu_custom_call.1} parent=1 // pred_region
      %s24 = ssub.s32 512, 512
      %25 = vsyncadd [#allocation5], %s24
      %s26 = sshll.u32 [#allocation4], 4
      %s27 = int_to_ptr.vmem [resolvable:$true] %s26
      %32 = dma.hbm_to_vmem [thread:$0]  %s0, 512, %s27, [#allocation5], 128, 128, 8
    $region5: #{tpu_custom_call.1} parent=1 // pred_fallthru
      _
    // Predicated region
    $region6: #{tpu_custom_call.1} parent=1 // pred_check
      _
    $region7: #{tpu_custom_call.1} parent=1 // pred_check_branch
      %34 = sbr.rel (0) target = $region9
    $region8: #{tpu_custom_call.1} parent=1 // pred_region
      %s36 = ssub.s32 3072, 3072
      %37 = vsyncadd [#allocation8], %s36
      %s38 = sshll.u32 [#allocation7], 4
      %s39 = int_to_ptr.vmem [resolvable:$true] %s38
      %44 = dma.hbm_to_vmem [thread:$0]  %s1, 3072, %s39, [#allocation8], 192, 192, 12
    $region9: #{tpu_custom_call.1} parent=1 // pred_fallthru
      _
    // Predicated region
    $region10: #{tpu_custom_call.1} parent=1 // pred_check
      _
    $region11: #{tpu_custom_call.1} parent=1 // pred_check_branch
      %46 = sbr.rel (0) target = $region13
    $region12: #{tpu_custom_call.1} parent=1 // pred_region
      _
    $region13: #{tpu_custom_call.1} parent=1 // pred_fallthru
      _
    // Predicated region
    $region14: #{tpu_custom_call.1} parent=1 // pred_check
      _
    $region15: #{tpu_custom_call.1} parent=1 // pred_check_branch
      %48 = sbr.rel (0) target = $region17
    $region16: #{tpu_custom_call.1} parent=1 // pred_region
      %s50 = ssub.s32 1024, 1024
      %51 = vsyncadd [#allocation8], %s50
      %s52 = sshll.u32 [#allocation9], 4
      %s53 = int_to_ptr.vmem [resolvable:$true] %s52
      %58 = dma.hbm_to_vmem [thread:$0]  %s3, 1024, %s53, [#allocation8], 64, 64, 4
    $region17: #{tpu_custom_call.1} parent=1 // pred_fallthru
      _
    // Predicated region
    $region18: #{tpu_custom_call.1} parent=1 // pred_check
      _
    $region19: #{tpu_custom_call.1} parent=1 // pred_check_branch
      %60 = sbr.rel (0) target = $region21
    $region20: #{tpu_custom_call.1} parent=1 // pred_region
      %s62 = ssub.s32 16, 16
      %63 = vsyncadd [#allocation11], %s62
      %s65 = sshll.u32 [#allocation10], 4
      %s66 = int_to_ptr.vmem [resolvable:$true] %s65
      %68 = dma.hbm_to_vmem [thread:$0]  %s4, 16, %s66, [#allocation11]
    $region21: #{tpu_custom_call.1} parent=1 // pred_fallthru
      _
    // Predicated region
    $region22: #{tpu_custom_call.1} parent=1 // pred_check
      _
    $region23: #{tpu_custom_call.1} parent=1 // pred_check_branch
      %70 = sbr.rel (0) target = $region25
    $region24: #{tpu_custom_call.1} parent=1 // pred_region
      _
    $region25: #{tpu_custom_call.1} parent=1 // pred_fallthru
      _
    // Predicated region
    $region26: #{tpu_custom_call.1} parent=1 // pred_check
      _
    $region27: #{tpu_custom_call.1} parent=1 // pred_check_branch
      %72 = sbr.rel (0) target = $region29
    $region28: #{tpu_custom_call.1} parent=1 // pred_region
      %s74 = ssub.s32 2048, 2048
      %75 = vsyncadd [#allocation11], %s74
      %s76 = sshll.u32 [#allocation12], 4
      %s77 = int_to_ptr.vmem [resolvable:$true] %s76
      %82 = dma.hbm_to_vmem [thread:$0]  %s6, 2048, %s77, [#allocation11], 128, 128, 8
    $region29: #{tpu_custom_call.1} parent=1 // pred_fallthru
      _
    // Predicated region
    $region30: #{tpu_custom_call.1} parent=1 // pred_check
      _
    $region31: #{tpu_custom_call.1} parent=1 // pred_check_branch
      %84 = sbr.rel (0) target = $region33
    $region32: #{tpu_custom_call.1} parent=1 // pred_region
      _
    $region33: #{tpu_custom_call.1} parent=1 // pred_fallthru
      _
    // Predicated region
    $region34: #{tpu_custom_call.1} parent=1 // pred_check
      _
    $region35: #{tpu_custom_call.1} parent=1 // pred_check_branch
      %86 = sbr.rel (0) target = $region37
    $region36: #{tpu_custom_call.1} parent=1 // pred_region
      %s88 = ssub.s32 2048, 2048
      %89 = vsyncadd [#allocation14], %s88
      %s90 = sshll.u32 [#allocation13], 4
      %s91 = int_to_ptr.vmem [resolvable:$true] %s90
      %96 = dma.hbm_to_vmem [thread:$0]  %s8, 2048, %s91, [#allocation14], 64, 64, 4
    $region37: #{tpu_custom_call.1} parent=1 // pred_fallthru
      _
    // Predicated region
    $region38: #{tpu_custom_call.1} parent=1 // pred_check
      _
    $region39: #{tpu_custom_call.1} parent=1 // pred_check_branch
      %98 = sbr.rel (0) target = $region41
    $region40: #{tpu_custom_call.1} parent=1 // pred_region
      _
    $region41: #{tpu_custom_call.1} parent=1 // pred_fallthru
      _
    // Predicated region
    $region42: #{tpu_custom_call.1} parent=1 // pred_check
      _
    $region43: #{tpu_custom_call.1} parent=1 // pred_check_branch
      %100 = sbr.rel (0) target = $region45
    $region44: #{tpu_custom_call.1} parent=1 // pred_region
      _
    $region45: #{tpu_custom_call.1} parent=1 // pred_fallthru
      _
    // Predicated region
    $region46: #{tpu_custom_call.1} parent=1 // pred_check
      _
    $region47: #{tpu_custom_call.1} parent=1 // pred_check_branch
      %102 = sbr.rel (0) target = $region49
    $region48: #{tpu_custom_call.1} parent=1 // pred_region
      %103 = dma.done [#allocation5], 512
    $region49: #{tpu_custom_call.1} parent=1 // pred_fallthru
      _
    // Predicated region
    $region50: #{tpu_custom_call.1} parent=1 // pred_check
      _
    $region51: #{tpu_custom_call.1} parent=1 // pred_check_branch
      %105 = sbr.rel (0) target = $region53
    $region52: #{tpu_custom_call.1} parent=1 // pred_region
      %106 = dma.done [#allocation8], 3072
    $region53: #{tpu_custom_call.1} parent=1 // pred_fallthru
      _
    // Predicated region
    $region54: #{tpu_custom_call.1} parent=1 // pred_check
      _
    $region55: #{tpu_custom_call.1} parent=1 // pred_check_branch
      %108 = sbr.rel (0) target = $region57
    $region56: #{tpu_custom_call.1} parent=1 // pred_region
      %109 = dma.done [#allocation8], 1024
    $region57: #{tpu_custom_call.1} parent=1 // pred_fallthru
      _
    // Predicated region
    $region58: #{tpu_custom_call.1} parent=1 // pred_check
      _
    $region59: #{tpu_custom_call.1} parent=1 // pred_check_branch
      %111 = sbr.rel (0) target = $region61
    $region60: #{tpu_custom_call.1} parent=1 // pred_region
      %112 = dma.done [#allocation11], 16
    $region61: #{tpu_custom_call.1} parent=1 // pred_fallthru
      _
    // Predicated region
    $region62: #{tpu_custom_call.1} parent=1 // pred_check
      _
    $region63: #{tpu_custom_call.1} parent=1 // pred_check_branch
      %114 = sbr.rel (0) target = $region65
    $region64: #{tpu_custom_call.1} parent=1 // pred_region
      %115 = dma.done [#allocation11], 2048
    $region65: #{tpu_custom_call.1} parent=1 // pred_fallthru
      _
    // Predicated region
    $region66: #{tpu_custom_call.1} parent=1 // pred_check
      _
    $region67: #{tpu_custom_call.1} parent=1 // pred_check_branch
      %117 = sbr.rel (0) target = $region69
    $region68: #{tpu_custom_call.1} parent=1 // pred_region
      %118 = dma.done [#allocation14], 2048
    $region69: #{tpu_custom_call.1} parent=1 // pred_fallthru
      _
    %v120 = vld [vmem:[#allocation4] sm:$0xff]
    %v121 = vld [vmem:[#allocation4 + $0x8] sm:$0xff]
    %v122 = vld [vmem:[#allocation4 + $0x10] sm:$0xff]
    %v123 = vld [vmem:[#allocation4 + $0x18] sm:$0xff]
    %v124 = vpack.c.bf16 %v121, %v120
    %v125 = vpack.c.bf16 %v123, %v122
    %v126 = vld [vmem:[#allocation7] sm:$0xff]
    %v127 = vld [vmem:[#allocation7 + $0x8] sm:$0xf]
    %v128 = vld [vmem:[#allocation7 + $0xc] sm:$0xff]
    %v129 = vld [vmem:[#allocation7 + $0x14] sm:$0xf]
    %v130 = vld [vmem:[#allocation7 + $0x18] sm:$0xff]
    %v131 = vld [vmem:[#allocation7 + $0x20] sm:$0xf]
    %v132 = vld [vmem:[#allocation7 + $0x24] sm:$0xff]
    %v133 = vld [vmem:[#allocation7 + $0x2c] sm:$0xf]
    %v134 = vld [vmem:[#allocation7 + $0x30] sm:$0xff]
    %v135 = vld [vmem:[#allocation7 + $0x38] sm:$0xf]
    %v136 = vld [vmem:[#allocation7 + $0x3c] sm:$0xff]
    %v137 = vld [vmem:[#allocation7 + $0x44] sm:$0xf]
    %v138 = vld [vmem:[#allocation7 + $0x48] sm:$0xff]
    %v139 = vld [vmem:[#allocation7 + $0x50] sm:$0xf]
    %v140 = vld [vmem:[#allocation7 + $0x54] sm:$0xff]
    %v141 = vld [vmem:[#allocation7 + $0x5c] sm:$0xf]
    %v142 = vld [vmem:[#allocation7 + $0x60] sm:$0xff]
    %v143 = vld [vmem:[#allocation7 + $0x68] sm:$0xf]
    %v144 = vld [vmem:[#allocation7 + $0x6c] sm:$0xff]
    %v145 = vld [vmem:[#allocation7 + $0x74] sm:$0xf]
    %v146 = vld [vmem:[#allocation7 + $0x78] sm:$0xff]
    %v147 = vld [vmem:[#allocation7 + $0x80] sm:$0xf]
    %v148 = vld [vmem:[#allocation7 + $0x84] sm:$0xff]
    %v149 = vld [vmem:[#allocation7 + $0x8c] sm:$0xf]
    %v150 = vld [vmem:[#allocation7 + $0x90] sm:$0xff]
    %v151 = vld [vmem:[#allocation7 + $0x98] sm:$0xf]
    %v152 = vld [vmem:[#allocation7 + $0x9c] sm:$0xff]
    %v153 = vld [vmem:[#allocation7 + $0xa4] sm:$0xf]
    %v154 = vld [vmem:[#allocation7 + $0xa8] sm:$0xff]
    %v155 = vld [vmem:[#allocation7 + $0xb0] sm:$0xf]
    %v156 = vld [vmem:[#allocation7 + $0xb4] sm:$0xff]
    %v157 = vld [vmem:[#allocation7 + $0xbc] sm:$0xf]
    %v158 = vld [vmem:[%s2] sm:$0x7]
    %v160 = vlaneseq
    %v161 = vshrl.u32 %v160, 7
    %v162 = vsub.s32 0, %v161
    %v163 = vrot.slane %v158, %v162
    %v164 = vlaneseq
    %v165 = vshrl.u32 %v164, 7
    %v166 = vsub.s32 1, %v165
    %v167 = vrot.slane %v158, %v166
    %v168 = vlaneseq
    %v169 = vshrl.u32 %v168, 7
    %v170 = vsub.s32 2, %v169
    %v171 = vrot.slane %v158, %v170
    %v207 = vunpack.c.l.b16 %v126
    %v208 = vunpack.c.h.b16 %v126
    %v209 = vunpack.c.l.b16 %v127
    %v210 = vunpack.c.l.b16 %v128
    %v211 = vunpack.c.h.b16 %v128
    %v212 = vunpack.c.l.b16 %v129
    %v213 = vunpack.c.l.b16 %v130
    %v214 = vunpack.c.h.b16 %v130
    %v215 = vunpack.c.l.b16 %v131
    %v216 = vunpack.c.l.b16 %v132
    %v217 = vunpack.c.h.b16 %v132
    %v218 = vunpack.c.l.b16 %v133
    %v219 = vunpack.c.l.b16 %v134
    %v220 = vunpack.c.h.b16 %v134
    %v221 = vunpack.c.l.b16 %v135
    %v222 = vunpack.c.l.b16 %v136
    %v223 = vunpack.c.h.b16 %v136
    %v224 = vunpack.c.l.b16 %v137
    %v225 = vunpack.c.l.b16 %v138
    %v226 = vunpack.c.h.b16 %v138
    %v227 = vunpack.c.l.b16 %v139
    %v228 = vunpack.c.l.b16 %v140
    %v229 = vunpack.c.h.b16 %v140
    %v230 = vunpack.c.l.b16 %v141
    %v231 = vunpack.c.l.b16 %v142
    %v232 = vunpack.c.h.b16 %v142
    %v233 = vunpack.c.l.b16 %v143
    %v234 = vunpack.c.l.b16 %v144
    %v235 = vunpack.c.h.b16 %v144
    %v236 = vunpack.c.l.b16 %v145
    %v237 = vunpack.c.l.b16 %v146
    %v238 = vunpack.c.h.b16 %v146
    %v239 = vunpack.c.l.b16 %v147
    %v240 = vunpack.c.l.b16 %v148
    %v241 = vunpack.c.h.b16 %v148
    %v242 = vunpack.c.l.b16 %v149
    %v243 = vunpack.c.l.b16 %v150
    %v244 = vunpack.c.h.b16 %v150
    %v245 = vunpack.c.l.b16 %v151
    %v246 = vunpack.c.l.b16 %v152
    %v247 = vunpack.c.h.b16 %v152
    %v248 = vunpack.c.l.b16 %v153
    %v249 = vunpack.c.l.b16 %v154
    %v250 = vunpack.c.h.b16 %v154
    %v251 = vunpack.c.l.b16 %v155
    %v252 = vunpack.c.l.b16 %v156
    %v253 = vunpack.c.h.b16 %v156
    %v254 = vunpack.c.l.b16 %v157
    %v255 = vpack.c.b16 %v210, %v207
    %v256 = vpack.c.b16 %v211, %v208
    %v257 = vpack.c.b16 %v212, %v209
    %v258 = vpack.c.b16 %v216, %v213
    %v259 = vpack.c.b16 %v217, %v214
    %v260 = vpack.c.b16 %v218, %v215
    %v261 = vpack.c.b16 %v222, %v219
    %v262 = vpack.c.b16 %v223, %v220
    %v263 = vpack.c.b16 %v224, %v221
    %v264 = vpack.c.b16 %v228, %v225
    %v265 = vpack.c.b16 %v229, %v226
    %v266 = vpack.c.b16 %v230, %v227
    %v267 = vpack.c.b16 %v234, %v231
    %v268 = vpack.c.b16 %v235, %v232
    %v269 = vpack.c.b16 %v236, %v233
    %v270 = vpack.c.b16 %v240, %v237
    %v271 = vpack.c.b16 %v241, %v238
    %v272 = vpack.c.b16 %v242, %v239
    %v273 = vpack.c.b16 %v246, %v243
    %v274 = vpack.c.b16 %v247, %v244
    %v275 = vpack.c.b16 %v248, %v245
    %v276 = vpack.c.b16 %v252, %v249
    %v277 = vpack.c.b16 %v253, %v250
    %v278 = vpack.c.b16 %v254, %v251
    %303 = vmatprep.subr.bf16.mxu0 %v277
    %304 = vmatpush1.bf16.msra.mxu0 %v276
    %305 = vmatprep.subr.bf16.mxu0 %v274
    %306 = vmatpush1.bf16.msra.mxu0 %v273
    %307 = vmatprep.subr.bf16.mxu0 %v271
    %308 = vmatpush1.bf16.msra.mxu0 %v270
    %309 = vmatprep.subr.bf16.mxu0 %v268
    %310 = vmatpush1.bf16.msra.mxu0 %v267
    %311 = vmatprep.subr.bf16.mxu0 %v265
    %312 = vmatpush1.bf16.msra.mxu0 %v264
    %313 = vmatprep.subr.bf16.mxu0 %v262
    %314 = vmatpush1.bf16.msra.mxu0 %v261
    %315 = vmatprep.subr.bf16.mxu0 %v259
    %316 = vmatpush1.bf16.msra.mxu0 %v258
    %317 = vmatprep.subr.bf16.mxu0 %v256
    %318 = vmatpush1.bf16.msra.mxu0 %v255
    %319 = vmatprep.subr.bf16.mxu0 0
    %320 = vmatpush2.bf16.msra.mxu0 0
    %321 = vmatprep.subr.bf16.mxu0 0
    %322 = vmatpush2.bf16.msra.mxu0 0
    %323 = vmatprep.subr.bf16.mxu0 0
    %324 = vmatpush2.bf16.msra.mxu0 0
    %325 = vmatprep.subr.bf16.mxu0 0
    %326 = vmatpush2.bf16.msra.mxu0 0
    %327 = vmatprep.subr.bf16.mxu0 0
    %328 = vmatpush2.bf16.msra.mxu0 0
    %329 = vmatprep.subr.bf16.mxu0 0
    %330 = vmatpush2.bf16.msra.mxu0 0
    %331 = vmatprep.subr.bf16.mxu0 0
    %332 = vmatpush2.bf16.msra.mxu0 0
    %333 = vmatprep.subr.bf16.mxu0 0
    %334 = vmatpush2.bf16.msra.mxu0 0
    %335 = vmatprep.mubr.bf16.mxu0 0
    %336 = vmatmul.mubr.bf16.gmra.mxu0 %v124
    %v337 = vpop.f32.mrf.mxu0
    %v338 = vadd.f32 %v163, %v337
    %v339 = vpop.f32.mrf.mxu0
    %v340 = vadd.f32 %v167, %v339
    %v341 = vpop.f32.mrf.mxu0
    %v342 = vadd.f32 %v163, %v341
    %v343 = vpop.f32.mrf.mxu0
    %v344 = vadd.f32 %v167, %v343
    %345 = vmatprep.mubr.bf16.mxu0 0
    %346 = vmatmul.mubr.bf16.gmra.mxu0 %v125
    %v347 = vpop.f32.mrf.mxu0
    %v348 = vadd.f32 %v163, %v347
    %v349 = vpop.f32.mrf.mxu0
    %v350 = vadd.f32 %v167, %v349
    %v351 = vpop.f32.mrf.mxu0
    %v352 = vadd.f32 %v163, %v351
    %v353 = vpop.f32.mrf.mxu0
    %v354 = vadd.f32 %v167, %v353
    %355 = vdwg.mxu0
    %356 = vmatprep.subr.bf16.mxu0 0
    %357 = vmatpush1.bf16.msra.mxu0 %v278
    %358 = vmatprep.subr.bf16.mxu0 0
    %359 = vmatpush1.bf16.msra.mxu0 %v275
    %360 = vmatprep.subr.bf16.mxu0 0
    %361 = vmatpush1.bf16.msra.mxu0 %v272
    %362 = vmatprep.subr.bf16.mxu0 0
    %363 = vmatpush1.bf16.msra.mxu0 %v269
    %364 = vmatprep.subr.bf16.mxu0 0
    %365 = vmatpush1.bf16.msra.mxu0 %v266
    %366 = vmatprep.subr.bf16.mxu0 0
    %367 = vmatpush1.bf16.msra.mxu0 %v263
    %368 = vmatprep.subr.bf16.mxu0 0
    %369 = vmatpush1.bf16.msra.mxu0 %v260
    %370 = vmatprep.subr.bf16.mxu0 0
    %371 = vmatpush1.bf16.msra.mxu0 %v257
    %372 = vmatprep.subr.bf16.mxu0 0
    %373 = vmatpush2.bf16.msra.mxu0 0
    %374 = vmatprep.subr.bf16.mxu0 0
    %375 = vmatpush2.bf16.msra.mxu0 0
    %376 = vmatprep.subr.bf16.mxu0 0
    %377 = vmatpush2.bf16.msra.mxu0 0
    %378 = vmatprep.subr.bf16.mxu0 0
    %379 = vmatpush2.bf16.msra.mxu0 0
    %380 = vmatprep.subr.bf16.mxu0 0
    %381 = vmatpush2.bf16.msra.mxu0 0
    %382 = vmatprep.subr.bf16.mxu0 0
    %383 = vmatpush2.bf16.msra.mxu0 0
    %384 = vmatprep.subr.bf16.mxu0 0
    %385 = vmatpush2.bf16.msra.mxu0 0
    %386 = vmatprep.subr.bf16.mxu0 0
    %387 = vmatpush2.bf16.msra.mxu0 0
    %388 = vmatprep.mubr.bf16.mxu0 0
    %389 = vmatmul.mubr.bf16.gmra.mxu0 %v124
    %v390 = vpop.f32.mrf.mxu0
    %v391 = vadd.f32 %v171, %v390
    %v392 = vpop.f32.mrf.mxu0
    %v393 = vpop.f32.mrf.mxu0
    %v394 = vadd.f32 %v171, %v393
    %v395 = vpop.f32.mrf.mxu0
    %396 = vmatprep.mubr.bf16.mxu0 0
    %397 = vmatmul.mubr.bf16.gmra.mxu0 %v125
    %v398 = vpop.f32.mrf.mxu0
    %v399 = vadd.f32 %v171, %v398
    %v400 = vpop.f32.mrf.mxu0
    %v401 = vpop.f32.mrf.mxu0
    %v402 = vadd.f32 %v171, %v401
    %v403 = vpop.f32.mrf.mxu0
    %404 = vdwg.mxu0
    %405 = vst [vmem:[#allocation2] sm:$0xff] %v338
    %406 = vst [vmem:[#allocation2 + $0x8] sm:$0xff] %v340
    %407 = vst [vmem:[#allocation2 + $0x10] sm:$0xff] %v391
    %408 = vst [vmem:[#allocation2 + $0x18] sm:$0xff] %v342
    %409 = vst [vmem:[#allocation2 + $0x20] sm:$0xff] %v344
    %410 = vst [vmem:[#allocation2 + $0x28] sm:$0xff] %v394
    %411 = vst [vmem:[#allocation2 + $0x30] sm:$0xff] %v348
    %412 = vst [vmem:[#allocation2 + $0x38] sm:$0xff] %v350
    %413 = vst [vmem:[#allocation2 + $0x40] sm:$0xff] %v399
    %414 = vst [vmem:[#allocation2 + $0x48] sm:$0xff] %v352
    %415 = vst [vmem:[#allocation2 + $0x50] sm:$0xff] %v354
    %416 = vst [vmem:[#allocation2 + $0x58] sm:$0xff] %v402
    %v417 = vld [vmem:[#allocation2] sm:$0xff]
    %v418 = vld [vmem:[#allocation2 + $0x18] sm:$0xff]
    %v419 = vld [vmem:[#allocation2 + $0x30] sm:$0xff]
    %v420 = vld [vmem:[#allocation2 + $0x48] sm:$0xff]
    %v421 = vpack.c.bf16 %v418, %v417
    %v422 = vpack.c.bf16 %v420, %v419
    %v423 = vld [vmem:[#allocation2 + $0x8] sm:$0xff]
    %v424 = vld [vmem:[#allocation2 + $0x20] sm:$0xff]
    %v425 = vld [vmem:[#allocation2 + $0x38] sm:$0xff]
    %v426 = vld [vmem:[#allocation2 + $0x50] sm:$0xff]
    %v427 = vpack.c.bf16 %v424, %v423
    %v428 = vpack.c.bf16 %v426, %v425
    %v429 = vld [vmem:[#allocation2 + $0x10] sm:$0xff]
    %v430 = vld [vmem:[#allocation2 + $0x28] sm:$0xff]
    %v431 = vld [vmem:[#allocation2 + $0x40] sm:$0xff]
    %v432 = vld [vmem:[#allocation2 + $0x58] sm:$0xff]
    %v433 = vpack.c.bf16 %v430, %v429
    %v434 = vpack.c.bf16 %v432, %v431
    %vm435 = vcmask 261120
    %v437 = vsel %vm435, %v421, 0
    %v440 = vsel %vm435, %v427, 0
    %442 = vmatprep.subr.bf16.mxu0 0
    %443 = vmatpush1.bf16.xpose.msra.mxu0 0
    %444 = vmatprep.subr.bf16.mxu0 0
    %445 = vmatpush1.bf16.xpose.msra.mxu0 0
    %446 = vmatprep.subr.bf16.mxu0 0
    %447 = vmatpush1.bf16.xpose.msra.mxu0 0
    %448 = vmatprep.subr.bf16.mxu0 0
    %449 = vmatpush1.bf16.xpose.msra.mxu0 0
    %450 = vmatprep.subr.bf16.mxu0 0
    %451 = vmatpush1.bf16.xpose.msra.mxu0 0
    %452 = vmatprep.subr.bf16.mxu0 0
    %453 = vmatpush1.bf16.xpose.msra.mxu0 0
    %454 = vmatprep.subr.bf16.mxu0 0
    %455 = vmatpush1.bf16.xpose.msra.mxu0 0
    %456 = vmatprep.subr.bf16.mxu0 0
    %457 = vmatpush1.bf16.xpose.msra.mxu0 %v440
    %458 = vmatprep.subr.bf16.mxu0 0
    %459 = vmatpush2.bf16.xpose.msra.mxu0 0
    %460 = vmatprep.subr.bf16.mxu0 0
    %461 = vmatpush2.bf16.xpose.msra.mxu0 0
    %462 = vmatprep.subr.bf16.mxu0 0
    %463 = vmatpush2.bf16.xpose.msra.mxu0 0
    %464 = vmatprep.subr.bf16.mxu0 0
    %465 = vmatpush2.bf16.xpose.msra.mxu0 0
    %466 = vmatprep.subr.bf16.mxu0 0
    %467 = vmatpush2.bf16.xpose.msra.mxu0 0
    %468 = vmatprep.subr.bf16.mxu0 0
    %469 = vmatpush2.bf16.xpose.msra.mxu0 0
    %470 = vmatprep.subr.bf16.mxu0 0
    %471 = vmatpush2.bf16.xpose.msra.mxu0 0
    %472 = vmatprep.subr.bf16.mxu0 0
    %473 = vmatpush2.bf16.xpose.msra.mxu0 0
    %474 = vmatprep.mubr.bf16.mxu0 0
    %475 = vmatmul.mubr.bf16.gmra.mxu0 %v437
    %v476 = vpop.f32.mrf.mxu0
    %v477 = vadd.f32 0.0, %v476
    %v478 = vpop.f32.mrf.mxu0
    %v479 = vpop.f32.mrf.mxu0
    %v480 = vadd.f32 0.0, %v479
    %v481 = vpop.f32.mrf.mxu0
    %482 = vdwg.mxu0
    %v484 = vsel %vm435, %v422, 0
    %v487 = vsel %vm435, %v428, 0
    %489 = vmatprep.subr.bf16.mxu0 0
    %490 = vmatpush1.bf16.xpose.msra.mxu0 0
    %491 = vmatprep.subr.bf16.mxu0 0
    %492 = vmatpush1.bf16.xpose.msra.mxu0 0
    %493 = vmatprep.subr.bf16.mxu0 0
    %494 = vmatpush1.bf16.xpose.msra.mxu0 0
    %495 = vmatprep.subr.bf16.mxu0 0
    %496 = vmatpush1.bf16.xpose.msra.mxu0 0
    %497 = vmatprep.subr.bf16.mxu0 0
    %498 = vmatpush1.bf16.xpose.msra.mxu0 0
    %499 = vmatprep.subr.bf16.mxu0 0
    %500 = vmatpush1.bf16.xpose.msra.mxu0 0
    %501 = vmatprep.subr.bf16.mxu0 0
    %502 = vmatpush1.bf16.xpose.msra.mxu0 0
    %503 = vmatprep.subr.bf16.mxu0 0
    %504 = vmatpush1.bf16.xpose.msra.mxu0 %v487
    %505 = vmatprep.subr.bf16.mxu0 0
    %506 = vmatpush2.bf16.xpose.msra.mxu0 0
    %507 = vmatprep.subr.bf16.mxu0 0
    %508 = vmatpush2.bf16.xpose.msra.mxu0 0
    %509 = vmatprep.subr.bf16.mxu0 0
    %510 = vmatpush2.bf16.xpose.msra.mxu0 0
    %511 = vmatprep.subr.bf16.mxu0 0
    %512 = vmatpush2.bf16.xpose.msra.mxu0 0
    %513 = vmatprep.subr.bf16.mxu0 0
    %514 = vmatpush2.bf16.xpose.msra.mxu0 0
    %515 = vmatprep.subr.bf16.mxu0 0
    %516 = vmatpush2.bf16.xpose.msra.mxu0 0
    %517 = vmatprep.subr.bf16.mxu0 0
    %518 = vmatpush2.bf16.xpose.msra.mxu0 0
    %519 = vmatprep.subr.bf16.mxu0 0
    %520 = vmatpush2.bf16.xpose.msra.mxu0 0
    %521 = vmatprep.mubr.bf16.mxu0 0
    %522 = vmatmul.mubr.bf16.gmra.mxu0 %v484
    %v523 = vpop.f32.mrf.mxu0
    %v524 = vadd.f32 0.0, %v523
    %v525 = vpop.f32.mrf.mxu0
    %v526 = vpop.f32.mrf.mxu0
    %v527 = vadd.f32 0.0, %v526
    %v528 = vpop.f32.mrf.mxu0
    %529 = vdwg.mxu0
    %vm530 = vcmask 130048
    %v531 = vsel %vm530, %v477, -inf
    %532 = vmax.xlane.f32.xlu0 %v531
    %v533 = vpop.xlane.xlu0 %532
    %v534 = vsel %vm530, %v480, -inf
    %535 = vmax.xlane.f32.xlu0 %v534
    %v536 = vpop.xlane.xlu0 %535
    %v537 = vsel %vm530, %v524, -inf
    %538 = vmax.xlane.f32.xlu0 %v537
    %v539 = vpop.xlane.xlu0 %538
    %v540 = vsel %vm530, %v527, -inf
    %541 = vmax.xlane.f32.xlu0 %v540
    %v542 = vpop.xlane.xlu0 %541
    %v543 = vsub.f32 %v477, %v533
    %v544 = vsub.f32 %v480, %v536
    %v545 = vsub.f32 %v524, %v539
    %v546 = vsub.f32 %v527, %v542
    %v547 = vmul.f32 %v543, 1.442695
    %v548 = vpow.pop %v547
    %v549 = vmul.f32 %v544, 1.442695
    %v550 = vpow.pop %v549
    %v551 = vmul.f32 %v545, 1.442695
    %v552 = vpow.pop %v551
    %v553 = vmul.f32 %v546, 1.442695
    %v554 = vpow.pop %v553
    %v555 = vsel %vm530, %v548, 0.0
    %556 = vadd.xlane.f32.xlu0 %v555
    %v557 = vpop.xlane.xlu0 %556
    %v558 = vsel %vm530, %v550, 0.0
    %559 = vadd.xlane.f32.xlu0 %v558
    %v560 = vpop.xlane.xlu0 %559
    %v561 = vsel %vm530, %v552, 0.0
    %562 = vadd.xlane.f32.xlu0 %v561
    %v563 = vpop.xlane.xlu0 %562
    %v564 = vsel %vm530, %v554, 0.0
    %565 = vadd.xlane.f32.xlu0 %v564
    %v566 = vpop.xlane.xlu0 %565
    %v567 = vrcp.pop %v557
    %v568 = vrcp.pop %v560
    %v569 = vrcp.pop %v563
    %v570 = vrcp.pop %v566
    %v571 = vmul.f32 %v548, %v567
    %v572 = vmul.f32 %v550, %v568
    %v573 = vmul.f32 %v552, %v569
    %v574 = vmul.f32 %v554, %v570
    %v575 = vpack.c.bf16 %v572, %v571
    %v576 = vpack.c.bf16 %v574, %v573
    %v578 = vsel %vm530, %v575, 0
    %580 = vmatprep.subr.bf16.mxu0 0
    %581 = vmatpush1.bf16.msra.mxu0 0
    %582 = vmatprep.subr.bf16.mxu0 0
    %583 = vmatpush1.bf16.msra.mxu0 0
    %584 = vmatprep.subr.bf16.mxu0 0
    %585 = vmatpush1.bf16.msra.mxu0 0
    %586 = vmatprep.subr.bf16.mxu0 0
    %587 = vmatpush1.bf16.msra.mxu0 0
    %588 = vmatprep.subr.bf16.mxu0 0
    %589 = vmatpush1.bf16.msra.mxu0 0
    %590 = vmatprep.subr.bf16.mxu0 0
    %591 = vmatpush1.bf16.msra.mxu0 0
    %592 = vmatprep.subr.bf16.mxu0 0
    %593 = vmatpush1.bf16.msra.mxu0 0
    %594 = vmatprep.subr.bf16.mxu0 0
    %595 = vmatpush1.bf16.msra.mxu0 %v433
    %596 = vmatprep.subr.bf16.mxu0 0
    %597 = vmatpush2.bf16.msra.mxu0 0
    %598 = vmatprep.subr.bf16.mxu0 0
    %599 = vmatpush2.bf16.msra.mxu0 0
    %600 = vmatprep.subr.bf16.mxu0 0
    %601 = vmatpush2.bf16.msra.mxu0 0
    %602 = vmatprep.subr.bf16.mxu0 0
    %603 = vmatpush2.bf16.msra.mxu0 0
    %604 = vmatprep.subr.bf16.mxu0 0
    %605 = vmatpush2.bf16.msra.mxu0 0
    %606 = vmatprep.subr.bf16.mxu0 0
    %607 = vmatpush2.bf16.msra.mxu0 0
    %608 = vmatprep.subr.bf16.mxu0 0
    %609 = vmatpush2.bf16.msra.mxu0 0
    %610 = vmatprep.subr.bf16.mxu0 0
    %611 = vmatpush2.bf16.msra.mxu0 0
    %612 = vmatprep.mubr.bf16.mxu0 0
    %613 = vmatmul.mubr.bf16.gmra.mxu0 %v578
    %v614 = vpop.f32.mrf.mxu0
    %v615 = vadd.f32 0.0, %v614
    %v616 = vpop.f32.mrf.mxu0
    %v617 = vpop.f32.mrf.mxu0
    %v618 = vadd.f32 0.0, %v617
    %v619 = vpop.f32.mrf.mxu0
    %620 = vdwg.mxu0
    %v622 = vsel %vm530, %v576, 0
    %624 = vmatprep.subr.bf16.mxu0 0
    %625 = vmatpush1.bf16.msra.mxu0 0
    %626 = vmatprep.subr.bf16.mxu0 0
    %627 = vmatpush1.bf16.msra.mxu0 0
    %628 = vmatprep.subr.bf16.mxu0 0
    %629 = vmatpush1.bf16.msra.mxu0 0
    %630 = vmatprep.subr.bf16.mxu0 0
    %631 = vmatpush1.bf16.msra.mxu0 0
    %632 = vmatprep.subr.bf16.mxu0 0
    %633 = vmatpush1.bf16.msra.mxu0 0
    %634 = vmatprep.subr.bf16.mxu0 0
    %635 = vmatpush1.bf16.msra.mxu0 0
    %636 = vmatprep.subr.bf16.mxu0 0
    %637 = vmatpush1.bf16.msra.mxu0 0
    %638 = vmatprep.subr.bf16.mxu0 0
    %639 = vmatpush1.bf16.msra.mxu0 %v434
    %640 = vmatprep.subr.bf16.mxu0 0
    %641 = vmatpush2.bf16.msra.mxu0 0
    %642 = vmatprep.subr.bf16.mxu0 0
    %643 = vmatpush2.bf16.msra.mxu0 0
    %644 = vmatprep.subr.bf16.mxu0 0
    %645 = vmatpush2.bf16.msra.mxu0 0
    %646 = vmatprep.subr.bf16.mxu0 0
    %647 = vmatpush2.bf16.msra.mxu0 0
    %648 = vmatprep.subr.bf16.mxu0 0
    %649 = vmatpush2.bf16.msra.mxu0 0
    %650 = vmatprep.subr.bf16.mxu0 0
    %651 = vmatpush2.bf16.msra.mxu0 0
    %652 = vmatprep.subr.bf16.mxu0 0
    %653 = vmatpush2.bf16.msra.mxu0 0
    %654 = vmatprep.subr.bf16.mxu0 0
    %655 = vmatpush2.bf16.msra.mxu0 0
    %656 = vmatprep.mubr.bf16.mxu0 0
    %657 = vmatmul.mubr.bf16.gmra.mxu0 %v622
    %v658 = vpop.f32.mrf.mxu0
    %v659 = vadd.f32 0.0, %v658
    %v660 = vpop.f32.mrf.mxu0
    %v661 = vpop.f32.mrf.mxu0
    %v662 = vadd.f32 0.0, %v661
    %v663 = vpop.f32.mrf.mxu0
    %664 = vdwg.mxu0
    %665 = vst.msk [vmem:[#allocation3] sm:$0xff] %vm435, %v615
    %666 = vst.msk [vmem:[#allocation3 + $0x8] sm:$0xff] %vm435, %v618
    %667 = vst.msk [vmem:[#allocation3 + $0x10] sm:$0xff] %vm435, %v659
    %668 = vst.msk [vmem:[#allocation3 + $0x18] sm:$0xff] %vm435, %v662
    %v669 = vld [vmem:[#allocation2] sm:$0xff]
    %v670 = vld [vmem:[#allocation2 + $0x18] sm:$0xff]
    %v671 = vld [vmem:[#allocation2 + $0x30] sm:$0xff]
    %v672 = vld [vmem:[#allocation2 + $0x48] sm:$0xff]
    %v673 = vpack.c.bf16 %v670, %v669
    %v674 = vpack.c.bf16 %v672, %v671
    %v675 = vld [vmem:[#allocation2 + $0x8] sm:$0xff]
    %v676 = vld [vmem:[#allocation2 + $0x20] sm:$0xff]
    %v677 = vld [vmem:[#allocation2 + $0x38] sm:$0xff]
    %v678 = vld [vmem:[#allocation2 + $0x50] sm:$0xff]
    %v679 = vpack.c.bf16 %v676, %v675
    %v680 = vpack.c.bf16 %v678, %v677
    %v681 = vld [vmem:[#allocation2 + $0x10] sm:$0xff]
    %v682 = vld [vmem:[#allocation2 + $0x28] sm:$0xff]
    %v683 = vld [vmem:[#allocation2 + $0x40] sm:$0xff]
    %v684 = vld [vmem:[#allocation2 + $0x58] sm:$0xff]
    %v685 = vpack.c.bf16 %v682, %v681
    %v686 = vpack.c.bf16 %v684, %v683
    %688 = vrot.lane.b32.xlu0 %v673, 96
    %v689 = vpop.permute.xlu0 %688
    %691 = vrot.lane.b32.xlu0 %v679, 96
    %v692 = vpop.permute.xlu0 %691
    %v694 = vsel %vm435, %v689, 0
    %v697 = vsel %vm435, %v692, 0
    %699 = vmatprep.subr.bf16.mxu0 0
    %700 = vmatpush1.bf16.xpose.msra.mxu0 0
    %701 = vmatprep.subr.bf16.mxu0 0
    %702 = vmatpush1.bf16.xpose.msra.mxu0 0
    %703 = vmatprep.subr.bf16.mxu0 0
    %704 = vmatpush1.bf16.xpose.msra.mxu0 0
    %705 = vmatprep.subr.bf16.mxu0 0
    %706 = vmatpush1.bf16.xpose.msra.mxu0 0
    %707 = vmatprep.subr.bf16.mxu0 0
    %708 = vmatpush1.bf16.xpose.msra.mxu0 0
    %709 = vmatprep.subr.bf16.mxu0 0
    %710 = vmatpush1.bf16.xpose.msra.mxu0 0
    %711 = vmatprep.subr.bf16.mxu0 0
    %712 = vmatpush1.bf16.xpose.msra.mxu0 0
    %713 = vmatprep.subr.bf16.mxu0 0
    %714 = vmatpush1.bf16.xpose.msra.mxu0 %v697
    %715 = vmatprep.subr.bf16.mxu0 0
    %716 = vmatpush2.bf16.xpose.msra.mxu0 0
    %717 = vmatprep.subr.bf16.mxu0 0
    %718 = vmatpush2.bf16.xpose.msra.mxu0 0
    %719 = vmatprep.subr.bf16.mxu0 0
    %720 = vmatpush2.bf16.xpose.msra.mxu0 0
    %721 = vmatprep.subr.bf16.mxu0 0
    %722 = vmatpush2.bf16.xpose.msra.mxu0 0
    %723 = vmatprep.subr.bf16.mxu0 0
    %724 = vmatpush2.bf16.xpose.msra.mxu0 0
    %725 = vmatprep.subr.bf16.mxu0 0
    %726 = vmatpush2.bf16.xpose.msra.mxu0 0
    %727 = vmatprep.subr.bf16.mxu0 0
    %728 = vmatpush2.bf16.xpose.msra.mxu0 0
    %729 = vmatprep.subr.bf16.mxu0 0
    %730 = vmatpush2.bf16.xpose.msra.mxu0 0
    %731 = vmatprep.mubr.bf16.mxu0 0
    %732 = vmatmul.mubr.bf16.gmra.mxu0 %v694
    %v733 = vpop.f32.mrf.mxu0
    %v734 = vadd.f32 0.0, %v733
    %v735 = vpop.f32.mrf.mxu0
    %v736 = vpop.f32.mrf.mxu0
    %v737 = vadd.f32 0.0, %v736
    %v738 = vpop.f32.mrf.mxu0
    %739 = vdwg.mxu0
    %741 = vrot.lane.b32.xlu0 %v674, 96
    %v742 = vpop.permute.xlu0 %741
    %744 = vrot.lane.b32.xlu0 %v680, 96
    %v745 = vpop.permute.xlu0 %744
    %v747 = vsel %vm435, %v742, 0
    %v750 = vsel %vm435, %v745, 0
    %752 = vmatprep.subr.bf16.mxu0 0
    %753 = vmatpush1.bf16.xpose.msra.mxu0 0
    %754 = vmatprep.subr.bf16.mxu0 0
    %755 = vmatpush1.bf16.xpose.msra.mxu0 0
    %756 = vmatprep.subr.bf16.mxu0 0
    %757 = vmatpush1.bf16.xpose.msra.mxu0 0
    %758 = vmatprep.subr.bf16.mxu0 0
    %759 = vmatpush1.bf16.xpose.msra.mxu0 0
    %760 = vmatprep.subr.bf16.mxu0 0
    %761 = vmatpush1.bf16.xpose.msra.mxu0 0
    %762 = vmatprep.subr.bf16.mxu0 0
    %763 = vmatpush1.bf16.xpose.msra.mxu0 0
    %764 = vmatprep.subr.bf16.mxu0 0
    %765 = vmatpush1.bf16.xpose.msra.mxu0 0
    %766 = vmatprep.subr.bf16.mxu0 0
    %767 = vmatpush1.bf16.xpose.msra.mxu0 %v750
    %768 = vmatprep.subr.bf16.mxu0 0
    %769 = vmatpush2.bf16.xpose.msra.mxu0 0
    %770 = vmatprep.subr.bf16.mxu0 0
    %771 = vmatpush2.bf16.xpose.msra.mxu0 0
    %772 = vmatprep.subr.bf16.mxu0 0
    %773 = vmatpush2.bf16.xpose.msra.mxu0 0
    %774 = vmatprep.subr.bf16.mxu0 0
    %775 = vmatpush2.bf16.xpose.msra.mxu0 0
    %776 = vmatprep.subr.bf16.mxu0 0
    %777 = vmatpush2.bf16.xpose.msra.mxu0 0
    %778 = vmatprep.subr.bf16.mxu0 0
    %779 = vmatpush2.bf16.xpose.msra.mxu0 0
    %780 = vmatprep.subr.bf16.mxu0 0
    %781 = vmatpush2.bf16.xpose.msra.mxu0 0
    %782 = vmatprep.subr.bf16.mxu0 0
    %783 = vmatpush2.bf16.xpose.msra.mxu0 0
    %784 = vmatprep.mubr.bf16.mxu0 0
    %785 = vmatmul.mubr.bf16.gmra.mxu0 %v747
    %v786 = vpop.f32.mrf.mxu0
    %v787 = vadd.f32 0.0, %v786
    %v788 = vpop.f32.mrf.mxu0
    %v789 = vpop.f32.mrf.mxu0
    %v790 = vadd.f32 0.0, %v789
    %v791 = vpop.f32.mrf.mxu0
    %792 = vdwg.mxu0
    %v793 = vsel %vm530, %v734, -inf
    %794 = vmax.xlane.f32.xlu0 %v793
    %v795 = vpop.xlane.xlu0 %794
    %v796 = vsel %vm530, %v737, -inf
    %797 = vmax.xlane.f32.xlu0 %v796
    %v798 = vpop.xlane.xlu0 %797
    %v799 = vsel %vm530, %v787, -inf
    %800 = vmax.xlane.f32.xlu0 %v799
    %v801 = vpop.xlane.xlu0 %800
    %v802 = vsel %vm530, %v790, -inf
    %803 = vmax.xlane.f32.xlu0 %v802
    %v804 = vpop.xlane.xlu0 %803
    %v805 = vsub.f32 %v734, %v795
    %v806 = vsub.f32 %v737, %v798
    %v807 = vsub.f32 %v787, %v801
    %v808 = vsub.f32 %v790, %v804
    %v809 = vmul.f32 %v805, 1.442695
    %v810 = vpow.pop %v809
    %v811 = vmul.f32 %v806, 1.442695
    %v812 = vpow.pop %v811
    %v813 = vmul.f32 %v807, 1.442695
    %v814 = vpow.pop %v813
    %v815 = vmul.f32 %v808, 1.442695
    %v816 = vpow.pop %v815
    %v817 = vsel %vm530, %v810, 0.0
    %818 = vadd.xlane.f32.xlu0 %v817
    %v819 = vpop.xlane.xlu0 %818
    %v820 = vsel %vm530, %v812, 0.0
    %821 = vadd.xlane.f32.xlu0 %v820
    %v822 = vpop.xlane.xlu0 %821
    %v823 = vsel %vm530, %v814, 0.0
    %824 = vadd.xlane.f32.xlu0 %v823
    %v825 = vpop.xlane.xlu0 %824
    %v826 = vsel %vm530, %v816, 0.0
    %827 = vadd.xlane.f32.xlu0 %v826
    %v828 = vpop.xlane.xlu0 %827
    %v829 = vrcp.pop %v819
    %v830 = vrcp.pop %v822
    %v831 = vrcp.pop %v825
    %v832 = vrcp.pop %v828
    %v833 = vmul.f32 %v810, %v829
    %v834 = vmul.f32 %v812, %v830
    %v835 = vmul.f32 %v814, %v831
    %v836 = vmul.f32 %v816, %v832
    %v837 = vpack.c.bf16 %v834, %v833
    %v838 = vpack.c.bf16 %v836, %v835
    %840 = vrot.lane.b32.xlu0 %v685, 96
    %v841 = vpop.permute.xlu0 %840
    %v844 = vsel %vm530, %v837, 0
    %846 = vmatprep.subr.bf16.mxu0 0
    %847 = vmatpush1.bf16.msra.mxu0 0
    %848 = vmatprep.subr.bf16.mxu0 0
    %849 = vmatpush1.bf16.msra.mxu0 0
    %850 = vmatprep.subr.bf16.mxu0 0
    %851 = vmatpush1.bf16.msra.mxu0 0
    %852 = vmatprep.subr.bf16.mxu0 0
    %853 = vmatpush1.bf16.msra.mxu0 0
    %854 = vmatprep.subr.bf16.mxu0 0
    %855 = vmatpush1.bf16.msra.mxu0 0
    %856 = vmatprep.subr.bf16.mxu0 0
    %857 = vmatpush1.bf16.msra.mxu0 0
    %858 = vmatprep.subr.bf16.mxu0 0
    %859 = vmatpush1.bf16.msra.mxu0 0
    %860 = vmatprep.subr.bf16.mxu0 0
    %861 = vmatpush1.bf16.msra.mxu0 %v841
    %862 = vmatprep.subr.bf16.mxu0 0
    %863 = vmatpush2.bf16.msra.mxu0 0
    %864 = vmatprep.subr.bf16.mxu0 0
    %865 = vmatpush2.bf16.msra.mxu0 0
    %866 = vmatprep.subr.bf16.mxu0 0
    %867 = vmatpush2.bf16.msra.mxu0 0
    %868 = vmatprep.subr.bf16.mxu0 0
    %869 = vmatpush2.bf16.msra.mxu0 0
    %870 = vmatprep.subr.bf16.mxu0 0
    %871 = vmatpush2.bf16.msra.mxu0 0
    %872 = vmatprep.subr.bf16.mxu0 0
    %873 = vmatpush2.bf16.msra.mxu0 0
    %874 = vmatprep.subr.bf16.mxu0 0
    %875 = vmatpush2.bf16.msra.mxu0 0
    %876 = vmatprep.subr.bf16.mxu0 0
    %877 = vmatpush2.bf16.msra.mxu0 0
    %878 = vmatprep.mubr.bf16.mxu0 0
    %879 = vmatmul.mubr.bf16.gmra.mxu0 %v844
    %v880 = vpop.f32.mrf.mxu0
    %v881 = vadd.f32 0.0, %v880
    %v882 = vpop.f32.mrf.mxu0
    %v883 = vpop.f32.mrf.mxu0
    %v884 = vadd.f32 0.0, %v883
    %v885 = vpop.f32.mrf.mxu0
    %886 = vdwg.mxu0
    %888 = vrot.lane.b32.xlu0 %v686, 96
    %v889 = vpop.permute.xlu0 %888
    %v892 = vsel %vm530, %v838, 0
    %894 = vmatprep.subr.bf16.mxu0 0
    %895 = vmatpush1.bf16.msra.mxu0 0
    %896 = vmatprep.subr.bf16.mxu0 0
    %897 = vmatpush1.bf16.msra.mxu0 0
    %898 = vmatprep.subr.bf16.mxu0 0
    %899 = vmatpush1.bf16.msra.mxu0 0
    %900 = vmatprep.subr.bf16.mxu0 0
    %901 = vmatpush1.bf16.msra.mxu0 0
    %902 = vmatprep.subr.bf16.mxu0 0
    %903 = vmatpush1.bf16.msra.mxu0 0
    %904 = vmatprep.subr.bf16.mxu0 0
    %905 = vmatpush1.bf16.msra.mxu0 0
    %906 = vmatprep.subr.bf16.mxu0 0
    %907 = vmatpush1.bf16.msra.mxu0 0
    %908 = vmatprep.subr.bf16.mxu0 0
    %909 = vmatpush1.bf16.msra.mxu0 %v889
    %910 = vmatprep.subr.bf16.mxu0 0
    %911 = vmatpush2.bf16.msra.mxu0 0
    %912 = vmatprep.subr.bf16.mxu0 0
    %913 = vmatpush2.bf16.msra.mxu0 0
    %914 = vmatprep.subr.bf16.mxu0 0
    %915 = vmatpush2.bf16.msra.mxu0 0
    %916 = vmatprep.subr.bf16.mxu0 0
    %917 = vmatpush2.bf16.msra.mxu0 0
    %918 = vmatprep.subr.bf16.mxu0 0
    %919 = vmatpush2.bf16.msra.mxu0 0
    %920 = vmatprep.subr.bf16.mxu0 0
    %921 = vmatpush2.bf16.msra.mxu0 0
    %922 = vmatprep.subr.bf16.mxu0 0
    %923 = vmatpush2.bf16.msra.mxu0 0
    %924 = vmatprep.subr.bf16.mxu0 0
    %925 = vmatpush2.bf16.msra.mxu0 0
    %926 = vmatprep.mubr.bf16.mxu0 0
    %927 = vmatmul.mubr.bf16.gmra.mxu0 %v892
    %v928 = vpop.f32.mrf.mxu0
    %v929 = vadd.f32 0.0, %v928
    %v930 = vpop.f32.mrf.mxu0
    %v931 = vpop.f32.mrf.mxu0
    %v932 = vadd.f32 0.0, %v931
    %v933 = vpop.f32.mrf.mxu0
    %934 = vdwg.mxu0
    %939 = vrot.lane.b32.xlu0 %v881, 32
    %v940 = vpop.permute.xlu0 %939
    %941 = vrot.lane.b32.xlu0 %v884, 32
    %v942 = vpop.permute.xlu0 %941
    %943 = vrot.lane.b32.xlu0 %v929, 32
    %v944 = vpop.permute.xlu0 %943
    %945 = vrot.lane.b32.xlu0 %v932, 32
    %v946 = vpop.permute.xlu0 %945
    %vm951 = vcmask 523520
    %952 = vst.msk [vmem:[#allocation3] sm:$0xff] %vm951, %v940
    %953 = vst.msk [vmem:[#allocation3 + $0x8] sm:$0xff] %vm951, %v942
    %954 = vst.msk [vmem:[#allocation3 + $0x10] sm:$0xff] %vm951, %v944
    %955 = vst.msk [vmem:[#allocation3 + $0x18] sm:$0xff] %vm951, %v946
    %v956 = vld [vmem:[#allocation2] sm:$0xff]
    %v957 = vld [vmem:[#allocation2 + $0x18] sm:$0xff]
    %v958 = vld [vmem:[#allocation2 + $0x30] sm:$0xff]
    %v959 = vld [vmem:[#allocation2 + $0x48] sm:$0xff]
    %v960 = vpack.c.bf16 %v957, %v956
    %v961 = vpack.c.bf16 %v959, %v958
    %v962 = vld [vmem:[#allocation2 + $0x8] sm:$0xff]
    %v963 = vld [vmem:[#allocation2 + $0x20] sm:$0xff]
    %v964 = vld [vmem:[#allocation2 + $0x38] sm:$0xff]
    %v965 = vld [vmem:[#allocation2 + $0x50] sm:$0xff]
    %v966 = vpack.c.bf16 %v963, %v962
    %v967 = vpack.c.bf16 %v965, %v964
    %v968 = vld [vmem:[#allocation2 + $0x10] sm:$0xff]
    %v969 = vld [vmem:[#allocation2 + $0x28] sm:$0xff]
    %v970 = vld [vmem:[#allocation2 + $0x40] sm:$0xff]
    %v971 = vld [vmem:[#allocation2 + $0x58] sm:$0xff]
    %v972 = vpack.c.bf16 %v969, %v968
    %v973 = vpack.c.bf16 %v971, %v970
    %975 = vrot.lane.b32.xlu0 %v960, 64
    %v976 = vpop.permute.xlu0 %975
    %978 = vrot.lane.b32.xlu0 %v966, 64
    %v979 = vpop.permute.xlu0 %978
    %v981 = vsel %vm435, %v976, 0
    %v984 = vsel %vm435, %v979, 0
    %986 = vmatprep.subr.bf16.mxu0 0
    %987 = vmatpush1.bf16.xpose.msra.mxu0 0
    %988 = vmatprep.subr.bf16.mxu0 0
    %989 = vmatpush1.bf16.xpose.msra.mxu0 0
    %990 = vmatprep.subr.bf16.mxu0 0
    %991 = vmatpush1.bf16.xpose.msra.mxu0 0
    %992 = vmatprep.subr.bf16.mxu0 0
    %993 = vmatpush1.bf16.xpose.msra.mxu0 0
    %994 = vmatprep.subr.bf16.mxu0 0
    %995 = vmatpush1.bf16.xpose.msra.mxu0 0
    %996 = vmatprep.subr.bf16.mxu0 0
    %997 = vmatpush1.bf16.xpose.msra.mxu0 0
    %998 = vmatprep.subr.bf16.mxu0 0
    %999 = vmatpush1.bf16.xpose.msra.mxu0 0
    %1000 = vmatprep.subr.bf16.mxu0 0
    %1001 = vmatpush1.bf16.xpose.msra.mxu0 %v984
    %1002 = vmatprep.subr.bf16.mxu0 0
    %1003 = vmatpush2.bf16.xpose.msra.mxu0 0
    %1004 = vmatprep.subr.bf16.mxu0 0
    %1005 = vmatpush2.bf16.xpose.msra.mxu0 0
    %1006 = vmatprep.subr.bf16.mxu0 0
    %1007 = vmatpush2.bf16.xpose.msra.mxu0 0
    %1008 = vmatprep.subr.bf16.mxu0 0
    %1009 = vmatpush2.bf16.xpose.msra.mxu0 0
    %1010 = vmatprep.subr.bf16.mxu0 0
    %1011 = vmatpush2.bf16.xpose.msra.mxu0 0
    %1012 = vmatprep.subr.bf16.mxu0 0
    %1013 = vmatpush2.bf16.xpose.msra.mxu0 0
    %1014 = vmatprep.subr.bf16.mxu0 0
    %1015 = vmatpush2.bf16.xpose.msra.mxu0 0
    %1016 = vmatprep.subr.bf16.mxu0 0
    %1017 = vmatpush2.bf16.xpose.msra.mxu0 0
    %1018 = vmatprep.mubr.bf16.mxu0 0
    %1019 = vmatmul.mubr.bf16.gmra.mxu0 %v981
    %v1020 = vpop.f32.mrf.mxu0
    %v1021 = vadd.f32 0.0, %v1020
    %v1022 = vpop.f32.mrf.mxu0
    %v1023 = vpop.f32.mrf.mxu0
    %v1024 = vadd.f32 0.0, %v1023
    %v1025 = vpop.f32.mrf.mxu0
    %1026 = vdwg.mxu0
    %1028 = vrot.lane.b32.xlu0 %v961, 64
    %v1029 = vpop.permute.xlu0 %1028
    %1031 = vrot.lane.b32.xlu0 %v967, 64
    %v1032 = vpop.permute.xlu0 %1031
    %v1034 = vsel %vm435, %v1029, 0
    %v1037 = vsel %vm435, %v1032, 0
    %1039 = vmatprep.subr.bf16.mxu0 0
    %1040 = vmatpush1.bf16.xpose.msra.mxu0 0
    %1041 = vmatprep.subr.bf16.mxu0 0
    %1042 = vmatpush1.bf16.xpose.msra.mxu0 0
    %1043 = vmatprep.subr.bf16.mxu0 0
    %1044 = vmatpush1.bf16.xpose.msra.mxu0 0
    %1045 = vmatprep.subr.bf16.mxu0 0
    %1046 = vmatpush1.bf16.xpose.msra.mxu0 0
    %1047 = vmatprep.subr.bf16.mxu0 0
    %1048 = vmatpush1.bf16.xpose.msra.mxu0 0
    %1049 = vmatprep.subr.bf16.mxu0 0
    %1050 = vmatpush1.bf16.xpose.msra.mxu0 0
    %1051 = vmatprep.subr.bf16.mxu0 0
    %1052 = vmatpush1.bf16.xpose.msra.mxu0 0
    %1053 = vmatprep.subr.bf16.mxu0 0
    %1054 = vmatpush1.bf16.xpose.msra.mxu0 %v1037
    %1055 = vmatprep.subr.bf16.mxu0 0
    %1056 = vmatpush2.bf16.xpose.msra.mxu0 0
    %1057 = vmatprep.subr.bf16.mxu0 0
    %1058 = vmatpush2.bf16.xpose.msra.mxu0 0
    %1059 = vmatprep.subr.bf16.mxu0 0
    %1060 = vmatpush2.bf16.xpose.msra.mxu0 0
    %1061 = vmatprep.subr.bf16.mxu0 0
    %1062 = vmatpush2.bf16.xpose.msra.mxu0 0
    %1063 = vmatprep.subr.bf16.mxu0 0
    %1064 = vmatpush2.bf16.xpose.msra.mxu0 0
    %1065 = vmatprep.subr.bf16.mxu0 0
    %1066 = vmatpush2.bf16.xpose.msra.mxu0 0
    %1067 = vmatprep.subr.bf16.mxu0 0
    %1068 = vmatpush2.bf16.xpose.msra.mxu0 0
    %1069 = vmatprep.subr.bf16.mxu0 0
    %1070 = vmatpush2.bf16.xpose.msra.mxu0 0
    %1071 = vmatprep.mubr.bf16.mxu0 0
    %1072 = vmatmul.mubr.bf16.gmra.mxu0 %v1034
    %v1073 = vpop.f32.mrf.mxu0
    %v1074 = vadd.f32 0.0, %v1073
    %v1075 = vpop.f32.mrf.mxu0
    %v1076 = vpop.f32.mrf.mxu0
    %v1077 = vadd.f32 0.0, %v1076
    %v1078 = vpop.f32.mrf.mxu0
    %1079 = vdwg.mxu0
    %v1080 = vsel %vm530, %v1021, -inf
    %1081 = vmax.xlane.f32.xlu0 %v1080
    %v1082 = vpop.xlane.xlu0 %1081
    %v1083 = vsel %vm530, %v1024, -inf
    %1084 = vmax.xlane.f32.xlu0 %v1083
    %v1085 = vpop.xlane.xlu0 %1084
    %v1086 = vsel %vm530, %v1074, -inf
    %1087 = vmax.xlane.f32.xlu0 %v1086
    %v1088 = vpop.xlane.xlu0 %1087
    %v1089 = vsel %vm530, %v1077, -inf
    %1090 = vmax.xlane.f32.xlu0 %v1089
    %v1091 = vpop.xlane.xlu0 %1090
    %v1092 = vsub.f32 %v1021, %v1082
    %v1093 = vsub.f32 %v1024, %v1085
    %v1094 = vsub.f32 %v1074, %v1088
    %v1095 = vsub.f32 %v1077, %v1091
    %v1096 = vmul.f32 %v1092, 1.442695
    %v1097 = vpow.pop %v1096
    %v1098 = vmul.f32 %v1093, 1.442695
    %v1099 = vpow.pop %v1098
    %v1100 = vmul.f32 %v1094, 1.442695
    %v1101 = vpow.pop %v1100
    %v1102 = vmul.f32 %v1095, 1.442695
    %v1103 = vpow.pop %v1102
    %v1104 = vsel %vm530, %v1097, 0.0
    %1105 = vadd.xlane.f32.xlu0 %v1104
    %v1106 = vpop.xlane.xlu0 %1105
    %v1107 = vsel %vm530, %v1099, 0.0
    %1108 = vadd.xlane.f32.xlu0 %v1107
    %v1109 = vpop.xlane.xlu0 %1108
    %v1110 = vsel %vm530, %v1101, 0.0
    %1111 = vadd.xlane.f32.xlu0 %v1110
    %v1112 = vpop.xlane.xlu0 %1111
    %v1113 = vsel %vm530, %v1103, 0.0
    %1114 = vadd.xlane.f32.xlu0 %v1113
    %v1115 = vpop.xlane.xlu0 %1114
    %v1116 = vrcp.pop %v1106
    %v1117 = vrcp.pop %v1109
    %v1118 = vrcp.pop %v1112
    %v1119 = vrcp.pop %v1115
    %v1120 = vmul.f32 %v1097, %v1116
    %v1121 = vmul.f32 %v1099, %v1117
    %v1122 = vmul.f32 %v1101, %v1118
    %v1123 = vmul.f32 %v1103, %v1119
    %v1124 = vpack.c.bf16 %v1121, %v1120
    %v1125 = vpack.c.bf16 %v1123, %v1122
    %1127 = vrot.lane.b32.xlu0 %v972, 64
    %v1128 = vpop.permute.xlu0 %1127
    %v1131 = vsel %vm530, %v1124, 0
    %1133 = vmatprep.subr.bf16.mxu0 0
    %1134 = vmatpush1.bf16.msra.mxu0 0
    %1135 = vmatprep.subr.bf16.mxu0 0
    %1136 = vmatpush1.bf16.msra.mxu0 0
    %1137 = vmatprep.subr.bf16.mxu0 0
    %1138 = vmatpush1.bf16.msra.mxu0 0
    %1139 = vmatprep.subr.bf16.mxu0 0
    %1140 = vmatpush1.bf16.msra.mxu0 0
    %1141 = vmatprep.subr.bf16.mxu0 0
    %1142 = vmatpush1.bf16.msra.mxu0 0
    %1143 = vmatprep.subr.bf16.mxu0 0
    %1144 = vmatpush1.bf16.msra.mxu0 0
    %1145 = vmatprep.subr.bf16.mxu0 0
    %1146 = vmatpush1.bf16.msra.mxu0 0
    %1147 = vmatprep.subr.bf16.mxu0 0
    %1148 = vmatpush1.bf16.msra.mxu0 %v1128
    %1149 = vmatprep.subr.bf16.mxu0 0
    %1150 = vmatpush2.bf16.msra.mxu0 0
    %1151 = vmatprep.subr.bf16.mxu0 0
    %1152 = vmatpush2.bf16.msra.mxu0 0
    %1153 = vmatprep.subr.bf16.mxu0 0
    %1154 = vmatpush2.bf16.msra.mxu0 0
    %1155 = vmatprep.subr.bf16.mxu0 0
    %1156 = vmatpush2.bf16.msra.mxu0 0
    %1157 = vmatprep.subr.bf16.mxu0 0
    %1158 = vmatpush2.bf16.msra.mxu0 0
    %1159 = vmatprep.subr.bf16.mxu0 0
    %1160 = vmatpush2.bf16.msra.mxu0 0
    %1161 = vmatprep.subr.bf16.mxu0 0
    %1162 = vmatpush2.bf16.msra.mxu0 0
    %1163 = vmatprep.subr.bf16.mxu0 0
    %1164 = vmatpush2.bf16.msra.mxu0 0
    %1165 = vmatprep.mubr.bf16.mxu0 0
    %1166 = vmatmul.mubr.bf16.gmra.mxu0 %v1131
    %v1167 = vpop.f32.mrf.mxu0
    %v1168 = vadd.f32 0.0, %v1167
    %v1169 = vpop.f32.mrf.mxu0
    %v1170 = vpop.f32.mrf.mxu0
    %v1171 = vadd.f32 0.0, %v1170
    %v1172 = vpop.f32.mrf.mxu0
    %1173 = vdwg.mxu0
    %1175 = vrot.lane.b32.xlu0 %v973, 64
    %v1176 = vpop.permute.xlu0 %1175
    %v1179 = vsel %vm530, %v1125, 0
    %1181 = vmatprep.subr.bf16.mxu0 0
    %1182 = vmatpush1.bf16.msra.mxu0 0
    %1183 = vmatprep.subr.bf16.mxu0 0
    %1184 = vmatpush1.bf16.msra.mxu0 0
    %1185 = vmatprep.subr.bf16.mxu0 0
    %1186 = vmatpush1.bf16.msra.mxu0 0
    %1187 = vmatprep.subr.bf16.mxu0 0
    %1188 = vmatpush1.bf16.msra.mxu0 0
    %1189 = vmatprep.subr.bf16.mxu0 0
    %1190 = vmatpush1.bf16.msra.mxu0 0
    %1191 = vmatprep.subr.bf16.mxu0 0
    %1192 = vmatpush1.bf16.msra.mxu0 0
    %1193 = vmatprep.subr.bf16.mxu0 0
    %1194 = vmatpush1.bf16.msra.mxu0 0
    %1195 = vmatprep.subr.bf16.mxu0 0
    %1196 = vmatpush1.bf16.msra.mxu0 %v1176
    %1197 = vmatprep.subr.bf16.mxu0 0
    %1198 = vmatpush2.bf16.msra.mxu0 0
    %1199 = vmatprep.subr.bf16.mxu0 0
    %1200 = vmatpush2.bf16.msra.mxu0 0
    %1201 = vmatprep.subr.bf16.mxu0 0
    %1202 = vmatpush2.bf16.msra.mxu0 0
    %1203 = vmatprep.subr.bf16.mxu0 0
    %1204 = vmatpush2.bf16.msra.mxu0 0
    %1205 = vmatprep.subr.bf16.mxu0 0
    %1206 = vmatpush2.bf16.msra.mxu0 0
    %1207 = vmatprep.subr.bf16.mxu0 0
    %1208 = vmatpush2.bf16.msra.mxu0 0
    %1209 = vmatprep.subr.bf16.mxu0 0
    %1210 = vmatpush2.bf16.msra.mxu0 0
    %1211 = vmatprep.subr.bf16.mxu0 0
    %1212 = vmatpush2.bf16.msra.mxu0 0
    %1213 = vmatprep.mubr.bf16.mxu0 0
    %1214 = vmatmul.mubr.bf16.gmra.mxu0 %v1179
    %v1215 = vpop.f32.mrf.mxu0
    %v1216 = vadd.f32 0.0, %v1215
    %v1217 = vpop.f32.mrf.mxu0
    %v1218 = vpop.f32.mrf.mxu0
    %v1219 = vadd.f32 0.0, %v1218
    %v1220 = vpop.f32.mrf.mxu0
    %1221 = vdwg.mxu0
    %1226 = vrot.lane.b32.xlu0 %v1168, 64
    %v1227 = vpop.permute.xlu0 %1226
    %1228 = vrot.lane.b32.xlu0 %v1171, 64
    %v1229 = vpop.permute.xlu0 %1228
    %1230 = vrot.lane.b32.xlu0 %v1216, 64
    %v1231 = vpop.permute.xlu0 %1230
    %1232 = vrot.lane.b32.xlu0 %v1219, 64
    %v1233 = vpop.permute.xlu0 %1232
    %vm1238 = vcmask 785920
    %1239 = vst.msk [vmem:[#allocation3] sm:$0xff] %vm1238, %v1227
    %1240 = vst.msk [vmem:[#allocation3 + $0x8] sm:$0xff] %vm1238, %v1229
    %1241 = vst.msk [vmem:[#allocation3 + $0x10] sm:$0xff] %vm1238, %v1231
    %1242 = vst.msk [vmem:[#allocation3 + $0x18] sm:$0xff] %vm1238, %v1233
    %v1243 = vld [vmem:[#allocation2] sm:$0xff]
    %v1244 = vld [vmem:[#allocation2 + $0x18] sm:$0xff]
    %v1245 = vld [vmem:[#allocation2 + $0x30] sm:$0xff]
    %v1246 = vld [vmem:[#allocation2 + $0x48] sm:$0xff]
    %v1247 = vpack.c.bf16 %v1244, %v1243
    %v1248 = vpack.c.bf16 %v1246, %v1245
    %v1249 = vld [vmem:[#allocation2 + $0x8] sm:$0xff]
    %v1250 = vld [vmem:[#allocation2 + $0x20] sm:$0xff]
    %v1251 = vld [vmem:[#allocation2 + $0x38] sm:$0xff]
    %v1252 = vld [vmem:[#allocation2 + $0x50] sm:$0xff]
    %v1253 = vpack.c.bf16 %v1250, %v1249
    %v1254 = vpack.c.bf16 %v1252, %v1251
    %v1255 = vld [vmem:[#allocation2 + $0x10] sm:$0xff]
    %v1256 = vld [vmem:[#allocation2 + $0x28] sm:$0xff]
    %v1257 = vld [vmem:[#allocation2 + $0x40] sm:$0xff]
    %v1258 = vld [vmem:[#allocation2 + $0x58] sm:$0xff]
    %v1259 = vpack.c.bf16 %v1256, %v1255
    %v1260 = vpack.c.bf16 %v1258, %v1257
    %1262 = vrot.lane.b32.xlu0 %v1247, 32
    %v1263 = vpop.permute.xlu0 %1262
    %1265 = vrot.lane.b32.xlu0 %v1253, 32
    %v1266 = vpop.permute.xlu0 %1265
    %v1268 = vsel %vm435, %v1263, 0
    %v1271 = vsel %vm435, %v1266, 0
    %1273 = vmatprep.subr.bf16.mxu0 0
    %1274 = vmatpush1.bf16.xpose.msra.mxu0 0
    %1275 = vmatprep.subr.bf16.mxu0 0
    %1276 = vmatpush1.bf16.xpose.msra.mxu0 0
    %1277 = vmatprep.subr.bf16.mxu0 0
    %1278 = vmatpush1.bf16.xpose.msra.mxu0 0
    %1279 = vmatprep.subr.bf16.mxu0 0
    %1280 = vmatpush1.bf16.xpose.msra.mxu0 0
    %1281 = vmatprep.subr.bf16.mxu0 0
    %1282 = vmatpush1.bf16.xpose.msra.mxu0 0
    %1283 = vmatprep.subr.bf16.mxu0 0
    %1284 = vmatpush1.bf16.xpose.msra.mxu0 0
    %1285 = vmatprep.subr.bf16.mxu0 0
    %1286 = vmatpush1.bf16.xpose.msra.mxu0 0
    %1287 = vmatprep.subr.bf16.mxu0 0
    %1288 = vmatpush1.bf16.xpose.msra.mxu0 %v1271
    %1289 = vmatprep.subr.bf16.mxu0 0
    %1290 = vmatpush2.bf16.xpose.msra.mxu0 0
    %1291 = vmatprep.subr.bf16.mxu0 0
    %1292 = vmatpush2.bf16.xpose.msra.mxu0 0
    %1293 = vmatprep.subr.bf16.mxu0 0
    %1294 = vmatpush2.bf16.xpose.msra.mxu0 0
    %1295 = vmatprep.subr.bf16.mxu0 0
    %1296 = vmatpush2.bf16.xpose.msra.mxu0 0
    %1297 = vmatprep.subr.bf16.mxu0 0
    %1298 = vmatpush2.bf16.xpose.msra.mxu0 0
    %1299 = vmatprep.subr.bf16.mxu0 0
    %1300 = vmatpush2.bf16.xpose.msra.mxu0 0
    %1301 = vmatprep.subr.bf16.mxu0 0
    %1302 = vmatpush2.bf16.xpose.msra.mxu0 0
    %1303 = vmatprep.subr.bf16.mxu0 0
    %1304 = vmatpush2.bf16.xpose.msra.mxu0 0
    %1305 = vmatprep.mubr.bf16.mxu0 0
    %1306 = vmatmul.mubr.bf16.gmra.mxu0 %v1268
    %v1307 = vpop.f32.mrf.mxu0
    %v1308 = vadd.f32 0.0, %v1307
    %v1309 = vpop.f32.mrf.mxu0
    %v1310 = vpop.f32.mrf.mxu0
    %v1311 = vadd.f32 0.0, %v1310
    %v1312 = vpop.f32.mrf.mxu0
    %1313 = vdwg.mxu0
    %1315 = vrot.lane.b32.xlu0 %v1248, 32
    %v1316 = vpop.permute.xlu0 %1315
    %1318 = vrot.lane.b32.xlu0 %v1254, 32
    %v1319 = vpop.permute.xlu0 %1318
    %v1321 = vsel %vm435, %v1316, 0
    %v1324 = vsel %vm435, %v1319, 0
    %1326 = vmatprep.subr.bf16.mxu0 0
    %1327 = vmatpush1.bf16.xpose.msra.mxu0 0
    %1328 = vmatprep.subr.bf16.mxu0 0
    %1329 = vmatpush1.bf16.xpose.msra.mxu0 0
    %1330 = vmatprep.subr.bf16.mxu0 0
    %1331 = vmatpush1.bf16.xpose.msra.mxu0 0
    %1332 = vmatprep.subr.bf16.mxu0 0
    %1333 = vmatpush1.bf16.xpose.msra.mxu0 0
    %1334 = vmatprep.subr.bf16.mxu0 0
    %1335 = vmatpush1.bf16.xpose.msra.mxu0 0
    %1336 = vmatprep.subr.bf16.mxu0 0
    %1337 = vmatpush1.bf16.xpose.msra.mxu0 0
    %1338 = vmatprep.subr.bf16.mxu0 0
    %1339 = vmatpush1.bf16.xpose.msra.mxu0 0
    %1340 = vmatprep.subr.bf16.mxu0 0
    %1341 = vmatpush1.bf16.xpose.msra.mxu0 %v1324
    %1342 = vmatprep.subr.bf16.mxu0 0
    %1343 = vmatpush2.bf16.xpose.msra.mxu0 0
    %1344 = vmatprep.subr.bf16.mxu0 0
    %1345 = vmatpush2.bf16.xpose.msra.mxu0 0
    %1346 = vmatprep.subr.bf16.mxu0 0
    %1347 = vmatpush2.bf16.xpose.msra.mxu0 0
    %1348 = vmatprep.subr.bf16.mxu0 0
    %1349 = vmatpush2.bf16.xpose.msra.mxu0 0
    %1350 = vmatprep.subr.bf16.mxu0 0
    %1351 = vmatpush2.bf16.xpose.msra.mxu0 0
    %1352 = vmatprep.subr.bf16.mxu0 0
    %1353 = vmatpush2.bf16.xpose.msra.mxu0 0
    %1354 = vmatprep.subr.bf16.mxu0 0
    %1355 = vmatpush2.bf16.xpose.msra.mxu0 0
    %1356 = vmatprep.subr.bf16.mxu0 0
    %1357 = vmatpush2.bf16.xpose.msra.mxu0 0
    %1358 = vmatprep.mubr.bf16.mxu0 0
    %1359 = vmatmul.mubr.bf16.gmra.mxu0 %v1321
    %v1360 = vpop.f32.mrf.mxu0
    %v1361 = vadd.f32 0.0, %v1360
    %v1362 = vpop.f32.mrf.mxu0
    %v1363 = vpop.f32.mrf.mxu0
    %v1364 = vadd.f32 0.0, %v1363
    %v1365 = vpop.f32.mrf.mxu0
    %1366 = vdwg.mxu0
    %v1367 = vsel %vm530, %v1308, -inf
    %1368 = vmax.xlane.f32.xlu0 %v1367
    %v1369 = vpop.xlane.xlu0 %1368
    %v1370 = vsel %vm530, %v1311, -inf
    %1371 = vmax.xlane.f32.xlu0 %v1370
    %v1372 = vpop.xlane.xlu0 %1371
    %v1373 = vsel %vm530, %v1361, -inf
    %1374 = vmax.xlane.f32.xlu0 %v1373
    %v1375 = vpop.xlane.xlu0 %1374
    %v1376 = vsel %vm530, %v1364, -inf
    %1377 = vmax.xlane.f32.xlu0 %v1376
    %v1378 = vpop.xlane.xlu0 %1377
    %v1379 = vsub.f32 %v1308, %v1369
    %v1380 = vsub.f32 %v1311, %v1372
    %v1381 = vsub.f32 %v1361, %v1375
    %v1382 = vsub.f32 %v1364, %v1378
    %v1383 = vmul.f32 %v1379, 1.442695
    %v1384 = vpow.pop %v1383
    %v1385 = vmul.f32 %v1380, 1.442695
    %v1386 = vpow.pop %v1385
    %v1387 = vmul.f32 %v1381, 1.442695
    %v1388 = vpow.pop %v1387
    %v1389 = vmul.f32 %v1382, 1.442695
    %v1390 = vpow.pop %v1389
    %v1391 = vsel %vm530, %v1384, 0.0
    %1392 = vadd.xlane.f32.xlu0 %v1391
    %v1393 = vpop.xlane.xlu0 %1392
    %v1394 = vsel %vm530, %v1386, 0.0
    %1395 = vadd.xlane.f32.xlu0 %v1394
    %v1396 = vpop.xlane.xlu0 %1395
    %v1397 = vsel %vm530, %v1388, 0.0
    %1398 = vadd.xlane.f32.xlu0 %v1397
    %v1399 = vpop.xlane.xlu0 %1398
    %v1400 = vsel %vm530, %v1390, 0.0
    %1401 = vadd.xlane.f32.xlu0 %v1400
    %v1402 = vpop.xlane.xlu0 %1401
    %v1403 = vrcp.pop %v1393
    %v1404 = vrcp.pop %v1396
    %v1405 = vrcp.pop %v1399
    %v1406 = vrcp.pop %v1402
    %v1407 = vmul.f32 %v1384, %v1403
    %v1408 = vmul.f32 %v1386, %v1404
    %v1409 = vmul.f32 %v1388, %v1405
    %v1410 = vmul.f32 %v1390, %v1406
    %v1411 = vpack.c.bf16 %v1408, %v1407
    %v1412 = vpack.c.bf16 %v1410, %v1409
    %1414 = vrot.lane.b32.xlu0 %v1259, 32
    %v1415 = vpop.permute.xlu0 %1414
    %v1418 = vsel %vm530, %v1411, 0
    %1420 = vmatprep.subr.bf16.mxu0 0
    %1421 = vmatpush1.bf16.msra.mxu0 0
    %1422 = vmatprep.subr.bf16.mxu0 0
    %1423 = vmatpush1.bf16.msra.mxu0 0
    %1424 = vmatprep.subr.bf16.mxu0 0
    %1425 = vmatpush1.bf16.msra.mxu0 0
    %1426 = vmatprep.subr.bf16.mxu0 0
    %1427 = vmatpush1.bf16.msra.mxu0 0
    %1428 = vmatprep.subr.bf16.mxu0 0
    %1429 = vmatpush1.bf16.msra.mxu0 0
    %1430 = vmatprep.subr.bf16.mxu0 0
    %1431 = vmatpush1.bf16.msra.mxu0 0
    %1432 = vmatprep.subr.bf16.mxu0 0
    %1433 = vmatpush1.bf16.msra.mxu0 0
    %1434 = vmatprep.subr.bf16.mxu0 0
    %1435 = vmatpush1.bf16.msra.mxu0 %v1415
    %1436 = vmatprep.subr.bf16.mxu0 0
    %1437 = vmatpush2.bf16.msra.mxu0 0
    %1438 = vmatprep.subr.bf16.mxu0 0
    %1439 = vmatpush2.bf16.msra.mxu0 0
    %1440 = vmatprep.subr.bf16.mxu0 0
    %1441 = vmatpush2.bf16.msra.mxu0 0
    %1442 = vmatprep.subr.bf16.mxu0 0
    %1443 = vmatpush2.bf16.msra.mxu0 0
    %1444 = vmatprep.subr.bf16.mxu0 0
    %1445 = vmatpush2.bf16.msra.mxu0 0
    %1446 = vmatprep.subr.bf16.mxu0 0
    %1447 = vmatpush2.bf16.msra.mxu0 0
    %1448 = vmatprep.subr.bf16.mxu0 0
    %1449 = vmatpush2.bf16.msra.mxu0 0
    %1450 = vmatprep.subr.bf16.mxu0 0
    %1451 = vmatpush2.bf16.msra.mxu0 0
    %1452 = vmatprep.mubr.bf16.mxu0 0
    %1453 = vmatmul.mubr.bf16.gmra.mxu0 %v1418
    %v1454 = vpop.f32.mrf.mxu0
    %v1455 = vadd.f32 0.0, %v1454
    %v1456 = vpop.f32.mrf.mxu0
    %v1457 = vpop.f32.mrf.mxu0
    %v1458 = vadd.f32 0.0, %v1457
    %v1459 = vpop.f32.mrf.mxu0
    %1460 = vdwg.mxu0
    %1462 = vrot.lane.b32.xlu0 %v1260, 32
    %v1463 = vpop.permute.xlu0 %1462
    %v1466 = vsel %vm530, %v1412, 0
    %1468 = vmatprep.subr.bf16.mxu0 0
    %1469 = vmatpush1.bf16.msra.mxu0 0
    %1470 = vmatprep.subr.bf16.mxu0 0
    %1471 = vmatpush1.bf16.msra.mxu0 0
    %1472 = vmatprep.subr.bf16.mxu0 0
    %1473 = vmatpush1.bf16.msra.mxu0 0
    %1474 = vmatprep.subr.bf16.mxu0 0
    %1475 = vmatpush1.bf16.msra.mxu0 0
    %1476 = vmatprep.subr.bf16.mxu0 0
    %1477 = vmatpush1.bf16.msra.mxu0 0
    %1478 = vmatprep.subr.bf16.mxu0 0
    %1479 = vmatpush1.bf16.msra.mxu0 0
    %1480 = vmatprep.subr.bf16.mxu0 0
    %1481 = vmatpush1.bf16.msra.mxu0 0
    %1482 = vmatprep.subr.bf16.mxu0 0
    %1483 = vmatpush1.bf16.msra.mxu0 %v1463
    %1484 = vmatprep.subr.bf16.mxu0 0
    %1485 = vmatpush2.bf16.msra.mxu0 0
    %1486 = vmatprep.subr.bf16.mxu0 0
    %1487 = vmatpush2.bf16.msra.mxu0 0
    %1488 = vmatprep.subr.bf16.mxu0 0
    %1489 = vmatpush2.bf16.msra.mxu0 0
    %1490 = vmatprep.subr.bf16.mxu0 0
    %1491 = vmatpush2.bf16.msra.mxu0 0
    %1492 = vmatprep.subr.bf16.mxu0 0
    %1493 = vmatpush2.bf16.msra.mxu0 0
    %1494 = vmatprep.subr.bf16.mxu0 0
    %1495 = vmatpush2.bf16.msra.mxu0 0
    %1496 = vmatprep.subr.bf16.mxu0 0
    %1497 = vmatpush2.bf16.msra.mxu0 0
    %1498 = vmatprep.subr.bf16.mxu0 0
    %1499 = vmatpush2.bf16.msra.mxu0 0
    %1500 = vmatprep.mubr.bf16.mxu0 0
    %1501 = vmatmul.mubr.bf16.gmra.mxu0 %v1466
    %v1502 = vpop.f32.mrf.mxu0
    %v1503 = vadd.f32 0.0, %v1502
    %v1504 = vpop.f32.mrf.mxu0
    %v1505 = vpop.f32.mrf.mxu0
    %v1506 = vadd.f32 0.0, %v1505
    %v1507 = vpop.f32.mrf.mxu0
    %1508 = vdwg.mxu0
    %1513 = vrot.lane.b32.xlu0 %v1455, 96
    %v1514 = vpop.permute.xlu0 %1513
    %1515 = vrot.lane.b32.xlu0 %v1458, 96
    %v1516 = vpop.permute.xlu0 %1515
    %1517 = vrot.lane.b32.xlu0 %v1503, 96
    %v1518 = vpop.permute.xlu0 %1517
    %1519 = vrot.lane.b32.xlu0 %v1506, 96
    %v1520 = vpop.permute.xlu0 %1519
    %vm1525 = vcmask 1048320
    %1526 = vst.msk [vmem:[#allocation3] sm:$0xff] %vm1525, %v1514
    %1527 = vst.msk [vmem:[#allocation3 + $0x8] sm:$0xff] %vm1525, %v1516
    %1528 = vst.msk [vmem:[#allocation3 + $0x10] sm:$0xff] %vm1525, %v1518
    %1529 = vst.msk [vmem:[#allocation3 + $0x18] sm:$0xff] %vm1525, %v1520
    %v1530 = vld [vmem:[#allocation3] sm:$0xff]
    %v1531 = vld [vmem:[#allocation3 + $0x8] sm:$0xff]
    %v1532 = vld [vmem:[#allocation3 + $0x10] sm:$0xff]
    %v1533 = vld [vmem:[#allocation3 + $0x18] sm:$0xff]
    %v1534 = vpack.c.bf16 %v1531, %v1530
    %v1535 = vpack.c.bf16 %v1533, %v1532
    %v1536 = vld [vmem:[#allocation9] sm:$0xf]
    %v1537 = vld [vmem:[#allocation9 + $0x4] sm:$0xf]
    %v1538 = vld [vmem:[#allocation9 + $0x8] sm:$0xf]
    %v1539 = vld [vmem:[#allocation9 + $0xc] sm:$0xf]
    %v1540 = vld [vmem:[#allocation9 + $0x10] sm:$0xf]
    %v1541 = vld [vmem:[#allocation9 + $0x14] sm:$0xf]
    %v1542 = vld [vmem:[#allocation9 + $0x18] sm:$0xf]
    %v1543 = vld [vmem:[#allocation9 + $0x1c] sm:$0xf]
    %v1544 = vld [vmem:[#allocation9 + $0x20] sm:$0xf]
    %v1545 = vld [vmem:[#allocation9 + $0x24] sm:$0xf]
    %v1546 = vld [vmem:[#allocation9 + $0x28] sm:$0xf]
    %v1547 = vld [vmem:[#allocation9 + $0x2c] sm:$0xf]
    %v1548 = vld [vmem:[#allocation9 + $0x30] sm:$0xf]
    %v1549 = vld [vmem:[#allocation9 + $0x34] sm:$0xf]
    %v1550 = vld [vmem:[#allocation9 + $0x38] sm:$0xf]
    %v1551 = vld [vmem:[#allocation9 + $0x3c] sm:$0xf]
    %v1552 = vld [vmem:[#allocation10] sm:$0x1]
    %v1554 = vlaneseq
    %v1555 = vshrl.u32 %v1554, 7
    %v1556 = vsub.s32 0, %v1555
    %v1557 = vrot.slane %v1552, %v1556
    %v1575 = vunpack.c.l.b16 %v1536
    %v1576 = vunpack.c.l.b16 %v1537
    %v1577 = vunpack.c.l.b16 %v1538
    %v1578 = vunpack.c.l.b16 %v1539
    %v1579 = vunpack.c.l.b16 %v1540
    %v1580 = vunpack.c.l.b16 %v1541
    %v1581 = vunpack.c.l.b16 %v1542
    %v1582 = vunpack.c.l.b16 %v1543
    %v1583 = vunpack.c.l.b16 %v1544
    %v1584 = vunpack.c.l.b16 %v1545
    %v1585 = vunpack.c.l.b16 %v1546
    %v1586 = vunpack.c.l.b16 %v1547
    %v1587 = vunpack.c.l.b16 %v1548
    %v1588 = vunpack.c.l.b16 %v1549
    %v1589 = vunpack.c.l.b16 %v1550
    %v1590 = vunpack.c.l.b16 %v1551
    %v1591 = vpack.c.b16 %v1576, %v1575
    %v1592 = vpack.c.b16 %v1578, %v1577
    %v1593 = vpack.c.b16 %v1580, %v1579
    %v1594 = vpack.c.b16 %v1582, %v1581
    %v1595 = vpack.c.b16 %v1584, %v1583
    %v1596 = vpack.c.b16 %v1586, %v1585
    %v1597 = vpack.c.b16 %v1588, %v1587
    %v1598 = vpack.c.b16 %v1590, %v1589
    %1607 = vmatprep.subr.bf16.mxu0 0
    %1608 = vmatpush1.bf16.msra.mxu0 %v1598
    %1609 = vmatprep.subr.bf16.mxu0 0
    %1610 = vmatpush1.bf16.msra.mxu0 %v1597
    %1611 = vmatprep.subr.bf16.mxu0 0
    %1612 = vmatpush1.bf16.msra.mxu0 %v1596
    %1613 = vmatprep.subr.bf16.mxu0 0
    %1614 = vmatpush1.bf16.msra.mxu0 %v1595
    %1615 = vmatprep.subr.bf16.mxu0 0
    %1616 = vmatpush1.bf16.msra.mxu0 %v1594
    %1617 = vmatprep.subr.bf16.mxu0 0
    %1618 = vmatpush1.bf16.msra.mxu0 %v1593
    %1619 = vmatprep.subr.bf16.mxu0 0
    %1620 = vmatpush1.bf16.msra.mxu0 %v1592
    %1621 = vmatprep.subr.bf16.mxu0 0
    %1622 = vmatpush1.bf16.msra.mxu0 %v1591
    %1623 = vmatprep.subr.bf16.mxu0 0
    %1624 = vmatpush2.bf16.msra.mxu0 0
    %1625 = vmatprep.subr.bf16.mxu0 0
    %1626 = vmatpush2.bf16.msra.mxu0 0
    %1627 = vmatprep.subr.bf16.mxu0 0
    %1628 = vmatpush2.bf16.msra.mxu0 0
    %1629 = vmatprep.subr.bf16.mxu0 0
    %1630 = vmatpush2.bf16.msra.mxu0 0
    %1631 = vmatprep.subr.bf16.mxu0 0
    %1632 = vmatpush2.bf16.msra.mxu0 0
    %1633 = vmatprep.subr.bf16.mxu0 0
    %1634 = vmatpush2.bf16.msra.mxu0 0
    %1635 = vmatprep.subr.bf16.mxu0 0
    %1636 = vmatpush2.bf16.msra.mxu0 0
    %1637 = vmatprep.subr.bf16.mxu0 0
    %1638 = vmatpush2.bf16.msra.mxu0 0
    %1639 = vmatprep.mubr.bf16.mxu0 0
    %1640 = vmatmul.mubr.bf16.gmra.mxu0 %v1534
    %v1641 = vpop.f32.mrf.mxu0
    %v1642 = vadd.f32 %v1557, %v1641
    %v1643 = vpop.f32.mrf.mxu0
    %v1644 = vpop.f32.mrf.mxu0
    %v1645 = vadd.f32 %v1557, %v1644
    %v1646 = vpop.f32.mrf.mxu0
    %1647 = vmatprep.mubr.bf16.mxu0 0
    %1648 = vmatmul.mubr.bf16.gmra.mxu0 %v1535
    %v1649 = vpop.f32.mrf.mxu0
    %v1650 = vadd.f32 %v1557, %v1649
    %v1651 = vpop.f32.mrf.mxu0
    %v1652 = vpop.f32.mrf.mxu0
    %v1653 = vadd.f32 %v1557, %v1652
    %v1654 = vpop.f32.mrf.mxu0
    %1655 = vdwg.mxu0
    %v1656 = vadd.f32 %v120, %v1642
    %v1657 = vadd.f32 %v121, %v1645
    %v1658 = vadd.f32 %v122, %v1650
    %v1659 = vadd.f32 %v123, %v1653
    %v1660 = vld [vmem:[%s5] sm:$0x1]
    %v1661 = vld [vmem:[%s5 + $0x1] sm:$0x1]
    %1662 = vadd.xlane.f32.xlu0 %v1656
    %v1663 = vpop.xlane.xlu0 %1662
    %1664 = vadd.xlane.f32.xlu0 %v1657
    %v1665 = vpop.xlane.xlu0 %1664
    %1666 = vadd.xlane.f32.xlu0 %v1658
    %v1667 = vpop.xlane.xlu0 %1666
    %1668 = vadd.xlane.f32.xlu0 %v1659
    %v1669 = vpop.xlane.xlu0 %1668
    %v1670 = vrcp.pop 128.0
    %v1671 = vmul.f32 %v1663, %v1670
    %v1672 = vmul.f32 %v1665, %v1670
    %v1673 = vmul.f32 %v1667, %v1670
    %v1674 = vmul.f32 %v1669, %v1670
    %v1675 = vsub.f32 %v1656, %v1671
    %v1676 = vsub.f32 %v1657, %v1672
    %v1677 = vsub.f32 %v1658, %v1673
    %v1678 = vsub.f32 %v1659, %v1674
    %v1679 = vmul.f32 %v1675, %v1675
    %v1680 = vmul.f32 %v1676, %v1676
    %v1681 = vmul.f32 %v1677, %v1677
    %v1682 = vmul.f32 %v1678, %v1678
    %1683 = vadd.xlane.f32.xlu0 %v1679
    %v1684 = vpop.xlane.xlu0 %1683
    %1685 = vadd.xlane.f32.xlu0 %v1680
    %v1686 = vpop.xlane.xlu0 %1685
    %1687 = vadd.xlane.f32.xlu0 %v1681
    %v1688 = vpop.xlane.xlu0 %1687
    %1689 = vadd.xlane.f32.xlu0 %v1682
    %v1690 = vpop.xlane.xlu0 %1689
    %v1691 = vmul.f32 %v1684, %v1670
    %v1692 = vmul.f32 %v1686, %v1670
    %v1693 = vmul.f32 %v1688, %v1670
    %v1694 = vmul.f32 %v1690, %v1670
    %v1695 = vadd.f32 %v1691, 1e-05
    %v1696 = vadd.f32 %v1692, 1e-05
    %v1697 = vadd.f32 %v1693, 1e-05
    %v1698 = vadd.f32 %v1694, 1e-05
    %v1699 = vrsqrt.pop %v1695
    %v1700 = vrsqrt.pop %v1696
    %v1701 = vrsqrt.pop %v1697
    %v1702 = vrsqrt.pop %v1698
    %v1703 = vmul.f32 %v1675, %v1699
    %v1704 = vmul.f32 %v1676, %v1700
    %v1705 = vmul.f32 %v1677, %v1701
    %v1706 = vmul.f32 %v1678, %v1702
    %v1707 = vlaneseq
    %v1708 = vshrl.u32 %v1707, 7
    %v1709 = vsub.s32 0, %v1708
    %v1710 = vrot.slane %v1660, %v1709
    %v1711 = vmul.f32 %v1703, %v1710
    %v1712 = vmul.f32 %v1704, %v1710
    %v1713 = vmul.f32 %v1705, %v1710
    %v1714 = vmul.f32 %v1706, %v1710
    %v1715 = vlaneseq
    %v1716 = vshrl.u32 %v1715, 7
    %v1717 = vsub.s32 0, %v1716
    %v1718 = vrot.slane %v1661, %v1717
    %v1719 = vadd.f32 %v1711, %v1718
    %v1720 = vadd.f32 %v1712, %v1718
    %v1721 = vadd.f32 %v1713, %v1718
    %v1722 = vadd.f32 %v1714, %v1718
    %v1723 = vpack.c.bf16 %v1720, %v1719
    %v1724 = vpack.c.bf16 %v1722, %v1721
    %v1725 = vld [vmem:[#allocation12] sm:$0xff]
    %v1726 = vld [vmem:[#allocation12 + $0x8] sm:$0xff]
    %v1727 = vld [vmem:[#allocation12 + $0x10] sm:$0xff]
    %v1728 = vld [vmem:[#allocation12 + $0x18] sm:$0xff]
    %v1729 = vld [vmem:[#allocation12 + $0x20] sm:$0xff]
    %v1730 = vld [vmem:[#allocation12 + $0x28] sm:$0xff]
    %v1731 = vld [vmem:[#allocation12 + $0x30] sm:$0xff]
    %v1732 = vld [vmem:[#allocation12 + $0x38] sm:$0xff]
    %v1733 = vld [vmem:[#allocation12 + $0x40] sm:$0xff]
    %v1734 = vld [vmem:[#allocation12 + $0x48] sm:$0xff]
    %v1735 = vld [vmem:[#allocation12 + $0x50] sm:$0xff]
    %v1736 = vld [vmem:[#allocation12 + $0x58] sm:$0xff]
    %v1737 = vld [vmem:[#allocation12 + $0x60] sm:$0xff]
    %v1738 = vld [vmem:[#allocation12 + $0x68] sm:$0xff]
    %v1739 = vld [vmem:[#allocation12 + $0x70] sm:$0xff]
    %v1740 = vld [vmem:[#allocation12 + $0x78] sm:$0xff]
    %v1741 = vld [vmem:[%s7] sm:$0x3]
    %v1743 = vlaneseq
    %v1744 = vshrl.u32 %v1743, 7
    %v1745 = vsub.s32 0, %v1744
    %v1746 = vrot.slane %v1741, %v1745
    %v1747 = vlaneseq
    %v1748 = vshrl.u32 %v1747, 7
    %v1749 = vsub.s32 1, %v1748
    %v1750 = vrot.slane %v1741, %v1749
    %v1769 = vunpack.c.l.b16 %v1725
    %v1770 = vunpack.c.h.b16 %v1725
    %v1771 = vunpack.c.l.b16 %v1726
    %v1772 = vunpack.c.h.b16 %v1726
    %v1773 = vunpack.c.l.b16 %v1727
    %v1774 = vunpack.c.h.b16 %v1727
    %v1775 = vunpack.c.l.b16 %v1728
    %v1776 = vunpack.c.h.b16 %v1728
    %v1777 = vunpack.c.l.b16 %v1729
    %v1778 = vunpack.c.h.b16 %v1729
    %v1779 = vunpack.c.l.b16 %v1730
    %v1780 = vunpack.c.h.b16 %v1730
    %v1781 = vunpack.c.l.b16 %v1731
    %v1782 = vunpack.c.h.b16 %v1731
    %v1783 = vunpack.c.l.b16 %v1732
    %v1784 = vunpack.c.h.b16 %v1732
    %v1785 = vunpack.c.l.b16 %v1733
    %v1786 = vunpack.c.h.b16 %v1733
    %v1787 = vunpack.c.l.b16 %v1734
    %v1788 = vunpack.c.h.b16 %v1734
    %v1789 = vunpack.c.l.b16 %v1735
    %v1790 = vunpack.c.h.b16 %v1735
    %v1791 = vunpack.c.l.b16 %v1736
    %v1792 = vunpack.c.h.b16 %v1736
    %v1793 = vunpack.c.l.b16 %v1737
    %v1794 = vunpack.c.h.b16 %v1737
    %v1795 = vunpack.c.l.b16 %v1738
    %v1796 = vunpack.c.h.b16 %v1738
    %v1797 = vunpack.c.l.b16 %v1739
    %v1798 = vunpack.c.h.b16 %v1739
    %v1799 = vunpack.c.l.b16 %v1740
    %v1800 = vunpack.c.h.b16 %v1740
    %v1801 = vpack.c.b16 %v1771, %v1769
    %v1802 = vpack.c.b16 %v1772, %v1770
    %v1803 = vpack.c.b16 %v1775, %v1773
    %v1804 = vpack.c.b16 %v1776, %v1774
    %v1805 = vpack.c.b16 %v1779, %v1777
    %v1806 = vpack.c.b16 %v1780, %v1778
    %v1807 = vpack.c.b16 %v1783, %v1781
    %v1808 = vpack.c.b16 %v1784, %v1782
    %v1809 = vpack.c.b16 %v1787, %v1785
    %v1810 = vpack.c.b16 %v1788, %v1786
    %v1811 = vpack.c.b16 %v1791, %v1789
    %v1812 = vpack.c.b16 %v1792, %v1790
    %v1813 = vpack.c.b16 %v1795, %v1793
    %v1814 = vpack.c.b16 %v1796, %v1794
    %v1815 = vpack.c.b16 %v1799, %v1797
    %v1816 = vpack.c.b16 %v1800, %v1798
    %1833 = vmatprep.subr.bf16.mxu0 %v1816
    %1834 = vmatpush1.bf16.msra.mxu0 %v1815
    %1835 = vmatprep.subr.bf16.mxu0 %v1814
    %1836 = vmatpush1.bf16.msra.mxu0 %v1813
    %1837 = vmatprep.subr.bf16.mxu0 %v1812
    %1838 = vmatpush1.bf16.msra.mxu0 %v1811
    %1839 = vmatprep.subr.bf16.mxu0 %v1810
    %1840 = vmatpush1.bf16.msra.mxu0 %v1809
    %1841 = vmatprep.subr.bf16.mxu0 %v1808
    %1842 = vmatpush1.bf16.msra.mxu0 %v1807
    %1843 = vmatprep.subr.bf16.mxu0 %v1806
    %1844 = vmatpush1.bf16.msra.mxu0 %v1805
    %1845 = vmatprep.subr.bf16.mxu0 %v1804
    %1846 = vmatpush1.bf16.msra.mxu0 %v1803
    %1847 = vmatprep.subr.bf16.mxu0 %v1802
    %1848 = vmatpush1.bf16.msra.mxu0 %v1801
    %1849 = vmatprep.subr.bf16.mxu0 0
    %1850 = vmatpush2.bf16.msra.mxu0 0
    %1851 = vmatprep.subr.bf16.mxu0 0
    %1852 = vmatpush2.bf16.msra.mxu0 0
    %1853 = vmatprep.subr.bf16.mxu0 0
    %1854 = vmatpush2.bf16.msra.mxu0 0
    %1855 = vmatprep.subr.bf16.mxu0 0
    %1856 = vmatpush2.bf16.msra.mxu0 0
    %1857 = vmatprep.subr.bf16.mxu0 0
    %1858 = vmatpush2.bf16.msra.mxu0 0
    %1859 = vmatprep.subr.bf16.mxu0 0
    %1860 = vmatpush2.bf16.msra.mxu0 0
    %1861 = vmatprep.subr.bf16.mxu0 0
    %1862 = vmatpush2.bf16.msra.mxu0 0
    %1863 = vmatprep.subr.bf16.mxu0 0
    %1864 = vmatpush2.bf16.msra.mxu0 0
    %1865 = vmatprep.mubr.bf16.mxu0 0
    %1866 = vmatmul.mubr.bf16.gmra.mxu0 %v1723
    %v1867 = vpop.f32.mrf.mxu0
    %v1868 = vadd.f32 %v1746, %v1867
    %v1869 = vpop.f32.mrf.mxu0
    %v1870 = vadd.f32 %v1750, %v1869
    %v1871 = vpop.f32.mrf.mxu0
    %v1872 = vadd.f32 %v1746, %v1871
    %v1873 = vpop.f32.mrf.mxu0
    %v1874 = vadd.f32 %v1750, %v1873
    %1875 = vmatprep.mubr.bf16.mxu0 0
    %1876 = vmatmul.mubr.bf16.gmra.mxu0 %v1724
    %v1877 = vpop.f32.mrf.mxu0
    %v1878 = vadd.f32 %v1746, %v1877
    %v1879 = vpop.f32.mrf.mxu0
    %v1880 = vadd.f32 %v1750, %v1879
    %v1881 = vpop.f32.mrf.mxu0
    %v1882 = vadd.f32 %v1746, %v1881
    %v1883 = vpop.f32.mrf.mxu0
    %v1884 = vadd.f32 %v1750, %v1883
    %1885 = vdwg.mxu0
    %v1886 = vmax.f32 %v1868, 0.0
    %v1887 = vmax.f32 %v1870, 0.0
    %v1888 = vmax.f32 %v1872, 0.0
    %v1889 = vmax.f32 %v1874, 0.0
    %v1890 = vmax.f32 %v1878, 0.0
    %v1891 = vmax.f32 %v1880, 0.0
    %v1892 = vmax.f32 %v1882, 0.0
    %v1893 = vmax.f32 %v1884, 0.0
    %v1894 = vpack.c.bf16 %v1888, %v1886
    %v1895 = vpack.c.bf16 %v1889, %v1887
    %v1896 = vpack.c.bf16 %v1892, %v1890
    %v1897 = vpack.c.bf16 %v1893, %v1891
    %v1898 = vld [vmem:[#allocation13] sm:$0xf]
    %v1899 = vld [vmem:[#allocation13 + $0x4] sm:$0xf]
    %v1900 = vld [vmem:[#allocation13 + $0x8] sm:$0xf]
    %v1901 = vld [vmem:[#allocation13 + $0xc] sm:$0xf]
    %v1902 = vld [vmem:[#allocation13 + $0x10] sm:$0xf]
    %v1903 = vld [vmem:[#allocation13 + $0x14] sm:$0xf]
    %v1904 = vld [vmem:[#allocation13 + $0x18] sm:$0xf]
    %v1905 = vld [vmem:[#allocation13 + $0x1c] sm:$0xf]
    %v1906 = vld [vmem:[#allocation13 + $0x20] sm:$0xf]
    %v1907 = vld [vmem:[#allocation13 + $0x24] sm:$0xf]
    %v1908 = vld [vmem:[#allocation13 + $0x28] sm:$0xf]
    %v1909 = vld [vmem:[#allocation13 + $0x2c] sm:$0xf]
    %v1910 = vld [vmem:[#allocation13 + $0x30] sm:$0xf]
    %v1911 = vld [vmem:[#allocation13 + $0x34] sm:$0xf]
    %v1912 = vld [vmem:[#allocation13 + $0x38] sm:$0xf]
    %v1913 = vld [vmem:[#allocation13 + $0x3c] sm:$0xf]
    %v1914 = vld [vmem:[#allocation13 + $0x40] sm:$0xf]
    %v1915 = vld [vmem:[#allocation13 + $0x44] sm:$0xf]
    %v1916 = vld [vmem:[#allocation13 + $0x48] sm:$0xf]
    %v1917 = vld [vmem:[#allocation13 + $0x4c] sm:$0xf]
    %v1918 = vld [vmem:[#allocation13 + $0x50] sm:$0xf]
    %v1919 = vld [vmem:[#allocation13 + $0x54] sm:$0xf]
    %v1920 = vld [vmem:[#allocation13 + $0x58] sm:$0xf]
    %v1921 = vld [vmem:[#allocation13 + $0x5c] sm:$0xf]
    %v1922 = vld [vmem:[#allocation13 + $0x60] sm:$0xf]
    %v1923 = vld [vmem:[#allocation13 + $0x64] sm:$0xf]
    %v1924 = vld [vmem:[#allocation13 + $0x68] sm:$0xf]
    %v1925 = vld [vmem:[#allocation13 + $0x6c] sm:$0xf]
    %v1926 = vld [vmem:[#allocation13 + $0x70] sm:$0xf]
    %v1927 = vld [vmem:[#allocation13 + $0x74] sm:$0xf]
    %v1928 = vld [vmem:[#allocation13 + $0x78] sm:$0xf]
    %v1929 = vld [vmem:[#allocation13 + $0x7c] sm:$0xf]
    %v1930 = vld [vmem:[%s9] sm:$0x1]
    %v1932 = vlaneseq
    %v1933 = vshrl.u32 %v1932, 7
    %v1934 = vsub.s32 0, %v1933
    %v1935 = vrot.slane %v1930, %v1934
    %v1969 = vunpack.c.l.b16 %v1898
    %v1970 = vunpack.c.l.b16 %v1899
    %v1971 = vunpack.c.l.b16 %v1900
    %v1972 = vunpack.c.l.b16 %v1901
    %v1973 = vunpack.c.l.b16 %v1902
    %v1974 = vunpack.c.l.b16 %v1903
    %v1975 = vunpack.c.l.b16 %v1904
    %v1976 = vunpack.c.l.b16 %v1905
    %v1977 = vunpack.c.l.b16 %v1906
    %v1978 = vunpack.c.l.b16 %v1907
    %v1979 = vunpack.c.l.b16 %v1908
    %v1980 = vunpack.c.l.b16 %v1909
    %v1981 = vunpack.c.l.b16 %v1910
    %v1982 = vunpack.c.l.b16 %v1911
    %v1983 = vunpack.c.l.b16 %v1912
    %v1984 = vunpack.c.l.b16 %v1913
    %v1985 = vunpack.c.l.b16 %v1914
    %v1986 = vunpack.c.l.b16 %v1915
    %v1987 = vunpack.c.l.b16 %v1916
    %v1988 = vunpack.c.l.b16 %v1917
    %v1989 = vunpack.c.l.b16 %v1918
    %v1990 = vunpack.c.l.b16 %v1919
    %v1991 = vunpack.c.l.b16 %v1920
    %v1992 = vunpack.c.l.b16 %v1921
    %v1993 = vunpack.c.l.b16 %v1922
    %v1994 = vunpack.c.l.b16 %v1923
    %v1995 = vunpack.c.l.b16 %v1924
    %v1996 = vunpack.c.l.b16 %v1925
    %v1997 = vunpack.c.l.b16 %v1926
    %v1998 = vunpack.c.l.b16 %v1927
    %v1999 = vunpack.c.l.b16 %v1928
    %v2000 = vunpack.c.l.b16 %v1929
    %v2001 = vpack.c.b16 %v1970, %v1969
    %v2002 = vpack.c.b16 %v1972, %v1971
    %v2003 = vpack.c.b16 %v1974, %v1973
    %v2004 = vpack.c.b16 %v1976, %v1975
    %v2005 = vpack.c.b16 %v1978, %v1977
    %v2006 = vpack.c.b16 %v1980, %v1979
    %v2007 = vpack.c.b16 %v1982, %v1981
    %v2008 = vpack.c.b16 %v1984, %v1983
    %v2009 = vpack.c.b16 %v1986, %v1985
    %v2010 = vpack.c.b16 %v1988, %v1987
    %v2011 = vpack.c.b16 %v1990, %v1989
    %v2012 = vpack.c.b16 %v1992, %v1991
    %v2013 = vpack.c.b16 %v1994, %v1993
    %v2014 = vpack.c.b16 %v1996, %v1995
    %v2015 = vpack.c.b16 %v1998, %v1997
    %v2016 = vpack.c.b16 %v2000, %v1999
    %2033 = vmatprep.subr.bf16.mxu0 0
    %2034 = vmatpush1.bf16.msra.mxu0 %v2008
    %2035 = vmatprep.subr.bf16.mxu0 0
    %2036 = vmatpush1.bf16.msra.mxu0 %v2007
    %2037 = vmatprep.subr.bf16.mxu0 0
    %2038 = vmatpush1.bf16.msra.mxu0 %v2006
    %2039 = vmatprep.subr.bf16.mxu0 0
    %2040 = vmatpush1.bf16.msra.mxu0 %v2005
    %2041 = vmatprep.subr.bf16.mxu0 0
    %2042 = vmatpush1.bf16.msra.mxu0 %v2004
    %2043 = vmatprep.subr.bf16.mxu0 0
    %2044 = vmatpush1.bf16.msra.mxu0 %v2003
    %2045 = vmatprep.subr.bf16.mxu0 0
    %2046 = vmatpush1.bf16.msra.mxu0 %v2002
    %2047 = vmatprep.subr.bf16.mxu0 0
    %2048 = vmatpush1.bf16.msra.mxu0 %v2001
    %2049 = vmatprep.subr.bf16.mxu0 0
    %2050 = vmatpush2.bf16.msra.mxu0 %v2016
    %2051 = vmatprep.subr.bf16.mxu0 0
    %2052 = vmatpush2.bf16.msra.mxu0 %v2015
    %2053 = vmatprep.subr.bf16.mxu0 0
    %2054 = vmatpush2.bf16.msra.mxu0 %v2014
    %2055 = vmatprep.subr.bf16.mxu0 0
    %2056 = vmatpush2.bf16.msra.mxu0 %v2013
    %2057 = vmatprep.subr.bf16.mxu0 0
    %2058 = vmatpush2.bf16.msra.mxu0 %v2012
    %2059 = vmatprep.subr.bf16.mxu0 0
    %2060 = vmatpush2.bf16.msra.mxu0 %v2011
    %2061 = vmatprep.subr.bf16.mxu0 0
    %2062 = vmatpush2.bf16.msra.mxu0 %v2010
    %2063 = vmatprep.subr.bf16.mxu0 0
    %2064 = vmatpush2.bf16.msra.mxu0 %v2009
    %2065 = vmatprep.mubr.bf16.mxu0 %v1895
    %2066 = vmatmul.mubr.bf16.gmra.mxu0 %v1894
    %v2067 = vpop.f32.mrf.mxu0
    %v2068 = vadd.f32 %v1935, %v2067
    %v2069 = vpop.f32.mrf.mxu0
    %v2070 = vpop.f32.mrf.mxu0
    %v2071 = vadd.f32 %v1935, %v2070
    %v2072 = vpop.f32.mrf.mxu0
    %2073 = vmatprep.mubr.bf16.mxu0 %v1897
    %2074 = vmatmul.mubr.bf16.gmra.mxu0 %v1896
    %v2075 = vpop.f32.mrf.mxu0
    %v2076 = vadd.f32 %v1935, %v2075
    %v2077 = vpop.f32.mrf.mxu0
    %v2078 = vpop.f32.mrf.mxu0
    %v2079 = vadd.f32 %v1935, %v2078
    %v2080 = vpop.f32.mrf.mxu0
    %2081 = vdwg.mxu0
    %v2082 = vadd.f32 %v1719, %v2068
    %v2083 = vadd.f32 %v1720, %v2071
    %v2084 = vadd.f32 %v1721, %v2076
    %v2085 = vadd.f32 %v1722, %v2079
    %v2086 = vld [vmem:[%s10] sm:$0x1]
    %v2087 = vld [vmem:[%s10 + $0x1] sm:$0x1]
    %2088 = vadd.xlane.f32.xlu0 %v2082
    %v2089 = vpop.xlane.xlu0 %2088
    %2090 = vadd.xlane.f32.xlu0 %v2083
    %v2091 = vpop.xlane.xlu0 %2090
    %2092 = vadd.xlane.f32.xlu0 %v2084
    %v2093 = vpop.xlane.xlu0 %2092
    %2094 = vadd.xlane.f32.xlu0 %v2085
    %v2095 = vpop.xlane.xlu0 %2094
    %v2096 = vmul.f32 %v2089, %v1670
    %v2097 = vmul.f32 %v2091, %v1670
    %v2098 = vmul.f32 %v2093, %v1670
    %v2099 = vmul.f32 %v2095, %v1670
    %v2100 = vsub.f32 %v2082, %v2096
    %v2101 = vsub.f32 %v2083, %v2097
    %v2102 = vsub.f32 %v2084, %v2098
    %v2103 = vsub.f32 %v2085, %v2099
    %v2104 = vmul.f32 %v2100, %v2100
    %v2105 = vmul.f32 %v2101, %v2101
    %v2106 = vmul.f32 %v2102, %v2102
    %v2107 = vmul.f32 %v2103, %v2103
    %2108 = vadd.xlane.f32.xlu0 %v2104
    %v2109 = vpop.xlane.xlu0 %2108
    %2110 = vadd.xlane.f32.xlu0 %v2105
    %v2111 = vpop.xlane.xlu0 %2110
    %2112 = vadd.xlane.f32.xlu0 %v2106
    %v2113 = vpop.xlane.xlu0 %2112
    %2114 = vadd.xlane.f32.xlu0 %v2107
    %v2115 = vpop.xlane.xlu0 %2114
    %v2116 = vmul.f32 %v2109, %v1670
    %v2117 = vmul.f32 %v2111, %v1670
    %v2118 = vmul.f32 %v2113, %v1670
    %v2119 = vmul.f32 %v2115, %v1670
    %v2120 = vadd.f32 %v2116, 1e-05
    %v2121 = vadd.f32 %v2117, 1e-05
    %v2122 = vadd.f32 %v2118, 1e-05
    %v2123 = vadd.f32 %v2119, 1e-05
    %v2124 = vrsqrt.pop %v2120
    %v2125 = vrsqrt.pop %v2121
    %v2126 = vrsqrt.pop %v2122
    %v2127 = vrsqrt.pop %v2123
    %v2128 = vmul.f32 %v2100, %v2124
    %v2129 = vmul.f32 %v2101, %v2125
    %v2130 = vmul.f32 %v2102, %v2126
    %v2131 = vmul.f32 %v2103, %v2127
    %v2132 = vlaneseq
    %v2133 = vshrl.u32 %v2132, 7
    %v2134 = vsub.s32 0, %v2133
    %v2135 = vrot.slane %v2086, %v2134
    %v2136 = vmul.f32 %v2128, %v2135
    %v2137 = vmul.f32 %v2129, %v2135
    %v2138 = vmul.f32 %v2130, %v2135
    %v2139 = vmul.f32 %v2131, %v2135
    %v2140 = vlaneseq
    %v2141 = vshrl.u32 %v2140, 7
    %v2142 = vsub.s32 0, %v2141
    %v2143 = vrot.slane %v2087, %v2142
    %v2144 = vadd.f32 %v2136, %v2143
    %v2145 = vadd.f32 %v2137, %v2143
    %v2146 = vadd.f32 %v2138, %v2143
    %v2147 = vadd.f32 %v2139, %v2143
    %2148 = vst [vmem:[#allocation15] sm:$0xff] %v2144
    %2149 = vst [vmem:[#allocation15 + $0x8] sm:$0xff] %v2145
    %2150 = vst [vmem:[#allocation15 + $0x10] sm:$0xff] %v2146
    %2151 = vst [vmem:[#allocation15 + $0x18] sm:$0xff] %v2147
    // Predicated region
    $region70: #{tpu_custom_call.1} parent=1 // pred_check
      _
    $region71: #{tpu_custom_call.1} parent=1 // pred_check_branch
      %2153 = sbr.rel (0) target = $region73
    $region72: #{tpu_custom_call.1} parent=1 // pred_region
      %s2155 = ssub.s32 512, 512
      %2156 = vsyncadd [#allocation6], %s2155
      %s2157 = sshll.u32 [#allocation15], 4
      %s2158 = int_to_ptr.vmem [resolvable:$true] %s2157
      %2163 = dma.vmem_to_hbm [thread:$0]  %s2158, 512, %s11, [#allocation6], 128, 128, 8
    $region73: #{tpu_custom_call.1} parent=1 // pred_fallthru
      _
    // Predicated region
    $region74: #{tpu_custom_call.1} parent=1 // pred_check
      _
    $region75: #{tpu_custom_call.1} parent=1 // pred_check_branch
      %2165 = sbr.rel (0) target = $region77
    $region76: #{tpu_custom_call.1} parent=1 // pred_region
      %2166 = dma.done [#allocation6], 512
    $region77: #{tpu_custom_call.1} parent=1 // pred_fallthru
      _
    %2167 = vsyncpa [#allocation5], 1
    %2168 = vsyncpa [#allocation8], 1
    %2169 = vsyncpa [#allocation11], 1
    %2170 = vsyncpa [#allocation14], 1
    %2171 = vsyncpa [#allocation6], 1

</llo_original>
